<compile_context>
chip_gen: v7x
topology: tpu7x:2x2x1
jax: 0.10.0
libtpu: 0.0.40
codegen_flags: <defaults>
</compile_context>

<pallas_src>
import jax
import jax.numpy as jnp
from jax.experimental import pallas as pl
from jax.experimental.pallas import tpu as pltpu


# ----------------------------- Pallas kernel --------------------------------
def _seq2seq_gru_kernel(ids_ref, emb_ref,
                        wxe_ref, whe_ref, gbe_ref, bhe_n_ref,
                        wxd_ref, whd_ref, gbd_ref, bhd_n_ref,
                        wp_ref, bp_ref,
                        out_ref):
    H = whe_ref.shape[0]
    S = ids_ref.shape[0]          # Sx + Sy
    Sy = out_ref.shape[0]
    Sx = S - Sy
    V = emb_ref.shape[0]
    f32 = jnp.float32
    bf16 = jnp.bfloat16

    # ---- single merged one-hot embedding gather (exact, MXU-friendly) ----
    onehot = (ids_ref[...] ==
              jax.lax.broadcasted_iota(jnp.int32, (S, V), 1)).astype(f32)   # (S, V)
    xy_emb = jnp.dot(onehot, emb_ref[...], preferred_element_type=f32)      # (S, H)
    x_emb = xy_emb[:Sx, :]
    y_emb = xy_emb[Sx:, :]

    # ---- hoist hidden-path weights / n-gate biases out of the serial loops ----
    whe = whe_ref[...]            # (H, 3H) bf16
    whd = whd_ref[...]            # (H, 3H) bf16
    bhe_n = bhe_n_ref[...]        # (1, H)  f32
    bhd_n = bhd_n_ref[...]        # (1, H)  f32

    def gru_step(h, gi, wh, bh_n):
        # h: (1, H) f32; gi: (1, 3H) f32 -- input-path pre-activation with the
        # input bias and the (step-invariant) r/z hidden biases already folded in.
        gh = jnp.dot(h.astype(bf16), wh, preferred_element_type=f32)        # (1, 3H)
        rz = jax.nn.sigmoid(gi[:, :2 * H] + gh[:, :2 * H])                  # fused r,z
        r = rz[:, :H]
        z = rz[:, H:]
        # n-gate hidden bias must stay inside r * (...) to match PyTorch GRU.
        n = jnp.tanh(gi[:, 2 * H:] + r * (gh[:, 2 * H:] + bh_n))
        return (1.0 - z) * n + z * h

    # ---- encoder: batched input-path gates, then unrolled recurrence ----
    gix = jnp.dot(x_emb.astype(bf16), wxe_ref[...],
                  preferred_element_type=f32) + gbe_ref[...]                # (Sx, 3H)
    h = jnp.zeros((1, H), f32)
    for t in range(Sx):
        h = gru_step(h, gix[t:t + 1, :], whe, bhe_n)
    enc_h = h                                                               # (1, H)

    # ---- decoder input-path gates: fused [y_emb | enc_h] @ [wxdy; wxdh] ----
    dec_in = jnp.concatenate(
        [y_emb, jnp.broadcast_to(enc_h, (Sy, H))], axis=1)                  # (Sy, 2H)
    giy = jnp.dot(dec_in.astype(bf16), wxd_ref[...],
                  preferred_element_type=f32) + gbd_ref[...]                # (Sy, 3H)

    # ---- decoder recurrence; keep hidden states in registers ----
    h = enc_h
    hs = []
    for t in range(Sy):
        h = gru_step(h, giy[t:t + 1, :], whd, bhd_n)
        hs.append(h)
    hdec = jnp.concatenate(hs, axis=0)                                      # (Sy, H)

    # ---- single batched vocab projection + one dense (Sy, V) store ----
    out_ref[...] = jnp.dot(hdec.astype(bf16), wp_ref[...],
                           preferred_element_type=f32) + bp_ref[...]


# ----------------------------- param preparation ------------------------------
def prepare_params(params):
    """One-time folding/casting so the jitted forward does no per-call conversion."""
    bf16 = jnp.bfloat16
    H = params["whe"].shape[0]
    # Fold the step-invariant r/z hidden biases into the batched input-path bias.
    gbe = params["bxe"].at[:, :2 * H].add(params["bhe"][:, :2 * H])
    gbd = params["bxd"].at[:, :2 * H].add(params["bhd"][:, :2 * H])
    return dict(
        emb=params["embedding"],
        wxe=params["wxe"].astype(bf16),
        whe=params["whe"].astype(bf16),
        gbe=gbe,
        bhe_n=params["bhe"][:, 2 * H:],
        wxd=jnp.concatenate([params["wxdy"], params["wxdh"]], axis=0).astype(bf16),
        whd=params["whd"].astype(bf16),
        gbd=gbd,
        bhd_n=params["bhd"][:, 2 * H:],
        wp=params["wp"].astype(bf16),
        bp=params["bp"],
    )


# ----------------------------- wrapper ---------------------------------------
def seq2seq_gru_forward(inputs, targets, kp):
    """inputs: (Sx,) int32 token ids, targets: (Sy,) int32 token ids, kp: prepare_params()."""
    H = kp["whe"].shape[0]
    V = kp["emb"].shape[0]
    Sx = int(inputs.shape[0])
    Sy = int(targets.shape[0])

    ids = jnp.concatenate([inputs, targets]).reshape(Sx + Sy, 1).astype(jnp.int32)

    args = (
        ids, kp["emb"],
        kp["wxe"], kp["whe"], kp["gbe"], kp["bhe_n"],
        kp["wxd"], kp["whd"], kp["gbd"], kp["bhd_n"],
        kp["wp"], kp["bp"],
    )

    flops = (2 * (Sx + Sy) * V * H              # merged one-hot embedding gather
             + 2 * Sx * H * 3 * H               # encoder batched input-path gates
             + 2 * Sy * (2 * H) * 3 * H         # decoder fused input-path gates
             + 2 * (Sx + Sy) * H * 3 * H        # recurrent hidden-path matmuls
             + 2 * Sy * H * V)                  # batched vocab projection
    bytes_accessed = int(sum(int(a.size) * a.dtype.itemsize for a in args)
                         + Sy * V * 4)

    out = pl.pallas_call(
        _seq2seq_gru_kernel,
        out_shape=jax.ShapeDtypeStruct((Sy, V), jnp.float32),
        in_specs=[pl.BlockSpec(memory_space=pltpu.MemorySpace.VMEM) for _ in args],
        out_specs=pl.BlockSpec(memory_space=pltpu.MemorySpace.VMEM),
        cost_estimate=pl.CostEstimate(
            flops=int(flops),
            transcendentals=int(3 * (Sx + Sy) * H),
            bytes_accessed=bytes_accessed),
    )(*args)
    return out


seq2seq_gru_forward_jit = jax.jit(seq2seq_gru_forward)


# ----------------------------- pure-JAX reference ----------------------------
def reference_forward(inputs, targets, params):
    hp = jax.lax.Precision.HIGHEST
    emb = params["embedding"]
    H = params["whe"].shape[0]
    x_emb = emb[inputs]
    y_emb = emb[targets]

    def gru_step(h, gi, wh, bh):
        gh = jnp.dot(h, wh, precision=hp) + bh
        r = jax.nn.sigmoid(gi[:, 0:H] + gh[:, 0:H])
        z = jax.nn.sigmoid(gi[:, H:2 * H] + gh[:, H:2 * H])
        n = jnp.tanh(gi[:, 2 * H:] + r * gh[:, 2 * H:])
        return (1.0 - z) * n + z * h

    h = jnp.zeros((1, H), jnp.float32)
    for t in range(x_emb.shape[0]):
        gi = jnp.dot(x_emb[t:t + 1], params["wxe"], precision=hp) + params["bxe"]
        h = gru_step(h, gi, params["whe"], params["bhe"])
    enc_h = h

    outs = []
    for t in range(y_emb.shape[0]):
        gi = (jnp.dot(y_emb[t:t + 1], params["wxdy"], precision=hp)
              + jnp.dot(enc_h, params["wxdh"], precision=hp)
              + params["bxd"])
        h = gru_step(h, gi, params["whd"], params["bhd"])
        outs.append(jnp.dot(h, params["wp"], precision=hp) + params["bp"])
    return jnp.concatenate(outs, axis=0)


# ----------------------------- parameter init --------------------------------
def init_params(key, vocab_size, hidden_size):
    H = hidden_size
    k = 1.0 / (H ** 0.5)
    ks = jax.random.split(key, 12)
    u = lambda kk, shape: jax.random.uniform(kk, shape, jnp.float32, -k, k)
    return dict(
        embedding=jax.random.normal(ks[0], (vocab_size, H), jnp.float32),
        # encoder GRU(H, H): fused gate weights (r,z,n) along the last dim
        wxe=u(ks[1], (H, 3 * H)), whe=u(ks[2], (H, 3 * H)),
        bxe=u(ks[3], (1, 3 * H)), bhe=u(ks[4], (1, 3 * H)),
        # decoder GRU(2H, H): input weight split into y-embedding part and enc-state part
        wxdy=u(ks[5], (H, 3 * H)), wxdh=u(ks[6], (H, 3 * H)),
        whd=u(ks[7], (H, 3 * H)),
        bxd=u(ks[8], (1, 3 * H)), bhd=u(ks[9], (1, 3 * H)),
        # projection Linear(H, vocab)
        wp=u(ks[10], (H, vocab_size)), bp=u(ks[11], (1, vocab_size)),
    )


if __name__ == "__main__":
    VOCAB = 256
    HIDDEN = 32
    SX = 8   # input sequence length
    SY = 8   # target sequence length

    key = jax.random.PRNGKey(0)
    kp_key, kx, ky = jax.random.split(key, 3)
    params = init_params(kp_key, VOCAB, HIDDEN)
    inputs = jax.random.randint(kx, (SX,), 0, VOCAB, dtype=jnp.int32)
    targets = jax.random.randint(ky, (SY,), 0, VOCAB, dtype=jnp.int32)

    kparams = prepare_params(params)          # one-time fold / bf16 cast / weight fusion
    out = seq2seq_gru_forward_jit(inputs, targets, kparams)
    out = jax.block_until_ready(out)

    ref = reference_forward(inputs, targets, params)
    assert out.shape == (SY, VOCAB), out.shape
    # bf16 MXU operands (f32 accumulation) vs. Precision.HIGHEST f32 reference.
    err = jnp.max(jnp.abs(out - ref))
    assert jnp.allclose(out, ref, rtol=2e-2, atol=2e-2), f"max abs err {err}"
    print("KERNEL_OK")
</pallas_src>

<mosaic_0001>
module attributes {stable_mosaic.version = 11 : i64} {
  func.func @_seq2seq_gru_kernel(%arg0: memref<16x1xi32, #tpu.memory_space<vmem>>, %arg1: memref<256x32xf32, #tpu.memory_space<vmem>>, %arg2: memref<32x96xbf16, #tpu.memory_space<vmem>>, %arg3: memref<32x96xbf16, #tpu.memory_space<vmem>>, %arg4: memref<1x96xf32, #tpu.memory_space<vmem>>, %arg5: memref<1x32xf32, #tpu.memory_space<vmem>>, %arg6: memref<64x96xbf16, #tpu.memory_space<vmem>>, %arg7: memref<32x96xbf16, #tpu.memory_space<vmem>>, %arg8: memref<1x96xf32, #tpu.memory_space<vmem>>, %arg9: memref<1x32xf32, #tpu.memory_space<vmem>>, %arg10: memref<32x256xbf16, #tpu.memory_space<vmem>>, %arg11: memref<1x256xf32, #tpu.memory_space<vmem>>, %arg12: memref<8x256xf32, #tpu.memory_space<vmem>>) attributes {dimension_semantics = [], scalar_prefetch = 0 : i64, scratch_operands = 0 : i64, tpu.core_type = #tpu.core_type<tc>} {
    %c0 = arith.constant 0 : index
    %c0_0 = arith.constant 0 : index
    %0 = vector.load %arg0[%c0, %c0_0] : memref<16x1xi32, #tpu.memory_space<vmem>>, vector<16x1xi32>
    %1 = tpu.iota {dimensions = array<i32: 1>} : vector<16x256xi32>
    %2 = vector.broadcast %0 : vector<16x1xi32> to vector<16x256xi32>
    %3 = arith.cmpi eq, %2, %1 : vector<16x256xi32>
    %4 = arith.extui %3 : vector<16x256xi1> to vector<16x256xi32>
    %5 = arith.sitofp %4 : vector<16x256xi32> to vector<16x256xf32>
    %c0_1 = arith.constant 0 : index
    %c0_2 = arith.constant 0 : index
    %6 = vector.load %arg1[%c0_1, %c0_2] : memref<256x32xf32, #tpu.memory_space<vmem>>, vector<256x32xf32>
    %cst = arith.constant dense<0.000000e+00> : vector<16x32xf32>
    %7 = tpu.matmul %5, %6, %cst {dimension_numbers = #tpu.dot_dimension_numbers<[1], [0], [0], [1], [0, 0, 1, 1], [], []>} : vector<16x256xf32>, vector<256x32xf32>, vector<16x32xf32> -> vector<16x32xf32>
    %8 = vector.extract_strided_slice %7 {offsets = [0, 0], sizes = [8, 32], strides = [1, 1]} : vector<16x32xf32> to vector<8x32xf32>
    %9 = vector.extract_strided_slice %7 {offsets = [8, 0], sizes = [8, 32], strides = [1, 1]} : vector<16x32xf32> to vector<8x32xf32>
    %c0_3 = arith.constant 0 : index
    %c0_4 = arith.constant 0 : index
    %10 = vector.load %arg3[%c0_3, %c0_4] : memref<32x96xbf16, #tpu.memory_space<vmem>>, vector<32x96xbf16>
    %c0_5 = arith.constant 0 : index
    %c0_6 = arith.constant 0 : index
    %11 = vector.load %arg7[%c0_5, %c0_6] : memref<32x96xbf16, #tpu.memory_space<vmem>>, vector<32x96xbf16>
    %c0_7 = arith.constant 0 : index
    %c0_8 = arith.constant 0 : index
    %12 = vector.load %arg5[%c0_7, %c0_8] : memref<1x32xf32, #tpu.memory_space<vmem>>, vector<1x32xf32>
    %c0_9 = arith.constant 0 : index
    %c0_10 = arith.constant 0 : index
    %13 = vector.load %arg9[%c0_9, %c0_10] : memref<1x32xf32, #tpu.memory_space<vmem>>, vector<1x32xf32>
    %14 = arith.truncf %8 : vector<8x32xf32> to vector<8x32xbf16>
    %c0_11 = arith.constant 0 : index
    %c0_12 = arith.constant 0 : index
    %15 = vector.load %arg2[%c0_11, %c0_12] : memref<32x96xbf16, #tpu.memory_space<vmem>>, vector<32x96xbf16>
    %cst_13 = arith.constant dense<0.000000e+00> : vector<8x96xf32>
    %16 = tpu.matmul %14, %15, %cst_13 {dimension_numbers = #tpu.dot_dimension_numbers<[1], [0], [0], [1], [0, 0, 1, 1], [], []>} : vector<8x32xbf16>, vector<32x96xbf16>, vector<8x96xf32> -> vector<8x96xf32>
    %c0_14 = arith.constant 0 : index
    %c0_15 = arith.constant 0 : index
    %17 = vector.load %arg4[%c0_14, %c0_15] : memref<1x96xf32, #tpu.memory_space<vmem>>, vector<1x96xf32>
    %18 = vector.broadcast %17 : vector<1x96xf32> to vector<8x96xf32>
    %19 = arith.addf %16, %18 : vector<8x96xf32>
    %cst_16 = arith.constant 0.000000e+00 : f32
    %20 = vector.broadcast %cst_16 : f32 to vector<1x32xf32>
    %21 = vector.extract_strided_slice %19 {offsets = [0, 0], sizes = [1, 96], strides = [1, 1]} : vector<8x96xf32> to vector<1x96xf32>
    %22 = arith.truncf %20 : vector<1x32xf32> to vector<1x32xbf16>
    %cst_17 = arith.constant dense<0.000000e+00> : vector<1x96xf32>
    %23 = tpu.matmul %22, %10, %cst_17 {dimension_numbers = #tpu.dot_dimension_numbers<[1], [0], [0], [1], [0, 0, 1, 1], [], []>} : vector<1x32xbf16>, vector<32x96xbf16>, vector<1x96xf32> -> vector<1x96xf32>
    %24 = vector.extract_strided_slice %21 {offsets = [0, 0], sizes = [1, 64], strides = [1, 1]} : vector<1x96xf32> to vector<1x64xf32>
    %25 = vector.extract_strided_slice %23 {offsets = [0, 0], sizes = [1, 64], strides = [1, 1]} : vector<1x96xf32> to vector<1x64xf32>
    %26 = arith.addf %24, %25 : vector<1x64xf32>
    %27 = arith.negf %26 : vector<1x64xf32>
    %28 = math.exp %27 : vector<1x64xf32>
    %cst_18 = arith.constant 1.000000e+00 : f32
    %29 = vector.broadcast %cst_18 : f32 to vector<1x64xf32>
    %30 = arith.addf %29, %28 : vector<1x64xf32>
    %31 = arith.divf %29, %30 : vector<1x64xf32>
    %32 = vector.extract_strided_slice %31 {offsets = [0, 0], sizes = [1, 32], strides = [1, 1]} : vector<1x64xf32> to vector<1x32xf32>
    %33 = vector.extract_strided_slice %31 {offsets = [0, 32], sizes = [1, 32], strides = [1, 1]} : vector<1x64xf32> to vector<1x32xf32>
    %34 = vector.extract_strided_slice %21 {offsets = [0, 64], sizes = [1, 32], strides = [1, 1]} : vector<1x96xf32> to vector<1x32xf32>
    %35 = vector.extract_strided_slice %23 {offsets = [0, 64], sizes = [1, 32], strides = [1, 1]} : vector<1x96xf32> to vector<1x32xf32>
    %36 = arith.addf %35, %12 : vector<1x32xf32>
    %37 = arith.mulf %32, %36 : vector<1x32xf32>
    %38 = arith.addf %34, %37 : vector<1x32xf32>
    %39 = math.tanh %38 : vector<1x32xf32>
    %cst_19 = arith.constant 1.000000e+00 : f32
    %40 = vector.broadcast %cst_19 : f32 to vector<1x32xf32>
    %41 = arith.subf %40, %33 : vector<1x32xf32>
    %42 = arith.mulf %41, %39 : vector<1x32xf32>
    %43 = arith.mulf %33, %20 : vector<1x32xf32>
    %44 = arith.addf %42, %43 : vector<1x32xf32>
    %45 = vector.extract_strided_slice %19 {offsets = [1, 0], sizes = [1, 96], strides = [1, 1]} : vector<8x96xf32> to vector<1x96xf32>
    %46 = arith.truncf %44 : vector<1x32xf32> to vector<1x32xbf16>
    %cst_20 = arith.constant dense<0.000000e+00> : vector<1x96xf32>
    %47 = tpu.matmul %46, %10, %cst_20 {dimension_numbers = #tpu.dot_dimension_numbers<[1], [0], [0], [1], [0, 0, 1, 1], [], []>} : vector<1x32xbf16>, vector<32x96xbf16>, vector<1x96xf32> -> vector<1x96xf32>
    %48 = vector.extract_strided_slice %45 {offsets = [0, 0], sizes = [1, 64], strides = [1, 1]} : vector<1x96xf32> to vector<1x64xf32>
    %49 = vector.extract_strided_slice %47 {offsets = [0, 0], sizes = [1, 64], strides = [1, 1]} : vector<1x96xf32> to vector<1x64xf32>
    %50 = arith.addf %48, %49 : vector<1x64xf32>
    %51 = arith.negf %50 : vector<1x64xf32>
    %52 = math.exp %51 : vector<1x64xf32>
    %cst_21 = arith.constant 1.000000e+00 : f32
    %53 = vector.broadcast %cst_21 : f32 to vector<1x64xf32>
    %54 = arith.addf %53, %52 : vector<1x64xf32>
    %55 = arith.divf %53, %54 : vector<1x64xf32>
    %56 = vector.extract_strided_slice %55 {offsets = [0, 0], sizes = [1, 32], strides = [1, 1]} : vector<1x64xf32> to vector<1x32xf32>
    %57 = vector.extract_strided_slice %55 {offsets = [0, 32], sizes = [1, 32], strides = [1, 1]} : vector<1x64xf32> to vector<1x32xf32>
    %58 = vector.extract_strided_slice %45 {offsets = [0, 64], sizes = [1, 32], strides = [1, 1]} : vector<1x96xf32> to vector<1x32xf32>
    %59 = vector.extract_strided_slice %47 {offsets = [0, 64], sizes = [1, 32], strides = [1, 1]} : vector<1x96xf32> to vector<1x32xf32>
    %60 = arith.addf %59, %12 : vector<1x32xf32>
    %61 = arith.mulf %56, %60 : vector<1x32xf32>
    %62 = arith.addf %58, %61 : vector<1x32xf32>
    %63 = math.tanh %62 : vector<1x32xf32>
    %cst_22 = arith.constant 1.000000e+00 : f32
    %64 = vector.broadcast %cst_22 : f32 to vector<1x32xf32>
    %65 = arith.subf %64, %57 : vector<1x32xf32>
    %66 = arith.mulf %65, %63 : vector<1x32xf32>
    %67 = arith.mulf %57, %44 : vector<1x32xf32>
    %68 = arith.addf %66, %67 : vector<1x32xf32>
    %69 = vector.extract_strided_slice %19 {offsets = [2, 0], sizes = [1, 96], strides = [1, 1]} : vector<8x96xf32> to vector<1x96xf32>
    %70 = arith.truncf %68 : vector<1x32xf32> to vector<1x32xbf16>
    %cst_23 = arith.constant dense<0.000000e+00> : vector<1x96xf32>
    %71 = tpu.matmul %70, %10, %cst_23 {dimension_numbers = #tpu.dot_dimension_numbers<[1], [0], [0], [1], [0, 0, 1, 1], [], []>} : vector<1x32xbf16>, vector<32x96xbf16>, vector<1x96xf32> -> vector<1x96xf32>
    %72 = vector.extract_strided_slice %69 {offsets = [0, 0], sizes = [1, 64], strides = [1, 1]} : vector<1x96xf32> to vector<1x64xf32>
    %73 = vector.extract_strided_slice %71 {offsets = [0, 0], sizes = [1, 64], strides = [1, 1]} : vector<1x96xf32> to vector<1x64xf32>
    %74 = arith.addf %72, %73 : vector<1x64xf32>
    %75 = arith.negf %74 : vector<1x64xf32>
    %76 = math.exp %75 : vector<1x64xf32>
    %cst_24 = arith.constant 1.000000e+00 : f32
    %77 = vector.broadcast %cst_24 : f32 to vector<1x64xf32>
    %78 = arith.addf %77, %76 : vector<1x64xf32>
    %79 = arith.divf %77, %78 : vector<1x64xf32>
    %80 = vector.extract_strided_slice %79 {offsets = [0, 0], sizes = [1, 32], strides = [1, 1]} : vector<1x64xf32> to vector<1x32xf32>
    %81 = vector.extract_strided_slice %79 {offsets = [0, 32], sizes = [1, 32], strides = [1, 1]} : vector<1x64xf32> to vector<1x32xf32>
    %82 = vector.extract_strided_slice %69 {offsets = [0, 64], sizes = [1, 32], strides = [1, 1]} : vector<1x96xf32> to vector<1x32xf32>
    %83 = vector.extract_strided_slice %71 {offsets = [0, 64], sizes = [1, 32], strides = [1, 1]} : vector<1x96xf32> to vector<1x32xf32>
    %84 = arith.addf %83, %12 : vector<1x32xf32>
    %85 = arith.mulf %80, %84 : vector<1x32xf32>
    %86 = arith.addf %82, %85 : vector<1x32xf32>
    %87 = math.tanh %86 : vector<1x32xf32>
    %cst_25 = arith.constant 1.000000e+00 : f32
    %88 = vector.broadcast %cst_25 : f32 to vector<1x32xf32>
    %89 = arith.subf %88, %81 : vector<1x32xf32>
    %90 = arith.mulf %89, %87 : vector<1x32xf32>
    %91 = arith.mulf %81, %68 : vector<1x32xf32>
    %92 = arith.addf %90, %91 : vector<1x32xf32>
    %93 = vector.extract_strided_slice %19 {offsets = [3, 0], sizes = [1, 96], strides = [1, 1]} : vector<8x96xf32> to vector<1x96xf32>
    %94 = arith.truncf %92 : vector<1x32xf32> to vector<1x32xbf16>
    %cst_26 = arith.constant dense<0.000000e+00> : vector<1x96xf32>
    %95 = tpu.matmul %94, %10, %cst_26 {dimension_numbers = #tpu.dot_dimension_numbers<[1], [0], [0], [1], [0, 0, 1, 1], [], []>} : vector<1x32xbf16>, vector<32x96xbf16>, vector<1x96xf32> -> vector<1x96xf32>
    %96 = vector.extract_strided_slice %93 {offsets = [0, 0], sizes = [1, 64], strides = [1, 1]} : vector<1x96xf32> to vector<1x64xf32>
    %97 = vector.extract_strided_slice %95 {offsets = [0, 0], sizes = [1, 64], strides = [1, 1]} : vector<1x96xf32> to vector<1x64xf32>
    %98 = arith.addf %96, %97 : vector<1x64xf32>
    %99 = arith.negf %98 : vector<1x64xf32>
    %100 = math.exp %99 : vector<1x64xf32>
    %cst_27 = arith.constant 1.000000e+00 : f32
    %101 = vector.broadcast %cst_27 : f32 to vector<1x64xf32>
    %102 = arith.addf %101, %100 : vector<1x64xf32>
    %103 = arith.divf %101, %102 : vector<1x64xf32>
    %104 = vector.extract_strided_slice %103 {offsets = [0, 0], sizes = [1, 32], strides = [1, 1]} : vector<1x64xf32> to vector<1x32xf32>
    %105 = vector.extract_strided_slice %103 {offsets = [0, 32], sizes = [1, 32], strides = [1, 1]} : vector<1x64xf32> to vector<1x32xf32>
    %106 = vector.extract_strided_slice %93 {offsets = [0, 64], sizes = [1, 32], strides = [1, 1]} : vector<1x96xf32> to vector<1x32xf32>
    %107 = vector.extract_strided_slice %95 {offsets = [0, 64], sizes = [1, 32], strides = [1, 1]} : vector<1x96xf32> to vector<1x32xf32>
    %108 = arith.addf %107, %12 : vector<1x32xf32>
    %109 = arith.mulf %104, %108 : vector<1x32xf32>
    %110 = arith.addf %106, %109 : vector<1x32xf32>
    %111 = math.tanh %110 : vector<1x32xf32>
    %cst_28 = arith.constant 1.000000e+00 : f32
    %112 = vector.broadcast %cst_28 : f32 to vector<1x32xf32>
    %113 = arith.subf %112, %105 : vector<1x32xf32>
    %114 = arith.mulf %113, %111 : vector<1x32xf32>
    %115 = arith.mulf %105, %92 : vector<1x32xf32>
    %116 = arith.addf %114, %115 : vector<1x32xf32>
    %117 = vector.extract_strided_slice %19 {offsets = [4, 0], sizes = [1, 96], strides = [1, 1]} : vector<8x96xf32> to vector<1x96xf32>
    %118 = arith.truncf %116 : vector<1x32xf32> to vector<1x32xbf16>
    %cst_29 = arith.constant dense<0.000000e+00> : vector<1x96xf32>
    %119 = tpu.matmul %118, %10, %cst_29 {dimension_numbers = #tpu.dot_dimension_numbers<[1], [0], [0], [1], [0, 0, 1, 1], [], []>} : vector<1x32xbf16>, vector<32x96xbf16>, vector<1x96xf32> -> vector<1x96xf32>
    %120 = vector.extract_strided_slice %117 {offsets = [0, 0], sizes = [1, 64], strides = [1, 1]} : vector<1x96xf32> to vector<1x64xf32>
    %121 = vector.extract_strided_slice %119 {offsets = [0, 0], sizes = [1, 64], strides = [1, 1]} : vector<1x96xf32> to vector<1x64xf32>
    %122 = arith.addf %120, %121 : vector<1x64xf32>
    %123 = arith.negf %122 : vector<1x64xf32>
    %124 = math.exp %123 : vector<1x64xf32>
    %cst_30 = arith.constant 1.000000e+00 : f32
    %125 = vector.broadcast %cst_30 : f32 to vector<1x64xf32>
    %126 = arith.addf %125, %124 : vector<1x64xf32>
    %127 = arith.divf %125, %126 : vector<1x64xf32>
    %128 = vector.extract_strided_slice %127 {offsets = [0, 0], sizes = [1, 32], strides = [1, 1]} : vector<1x64xf32> to vector<1x32xf32>
    %129 = vector.extract_strided_slice %127 {offsets = [0, 32], sizes = [1, 32], strides = [1, 1]} : vector<1x64xf32> to vector<1x32xf32>
    %130 = vector.extract_strided_slice %117 {offsets = [0, 64], sizes = [1, 32], strides = [1, 1]} : vector<1x96xf32> to vector<1x32xf32>
    %131 = vector.extract_strided_slice %119 {offsets = [0, 64], sizes = [1, 32], strides = [1, 1]} : vector<1x96xf32> to vector<1x32xf32>
    %132 = arith.addf %131, %12 : vector<1x32xf32>
    %133 = arith.mulf %128, %132 : vector<1x32xf32>
    %134 = arith.addf %130, %133 : vector<1x32xf32>
    %135 = math.tanh %134 : vector<1x32xf32>
    %cst_31 = arith.constant 1.000000e+00 : f32
    %136 = vector.broadcast %cst_31 : f32 to vector<1x32xf32>
    %137 = arith.subf %136, %129 : vector<1x32xf32>
    %138 = arith.mulf %137, %135 : vector<1x32xf32>
    %139 = arith.mulf %129, %116 : vector<1x32xf32>
    %140 = arith.addf %138, %139 : vector<1x32xf32>
    %141 = vector.extract_strided_slice %19 {offsets = [5, 0], sizes = [1, 96], strides = [1, 1]} : vector<8x96xf32> to vector<1x96xf32>
    %142 = arith.truncf %140 : vector<1x32xf32> to vector<1x32xbf16>
    %cst_32 = arith.constant dense<0.000000e+00> : vector<1x96xf32>
    %143 = tpu.matmul %142, %10, %cst_32 {dimension_numbers = #tpu.dot_dimension_numbers<[1], [0], [0], [1], [0, 0, 1, 1], [], []>} : vector<1x32xbf16>, vector<32x96xbf16>, vector<1x96xf32> -> vector<1x96xf32>
    %144 = vector.extract_strided_slice %141 {offsets = [0, 0], sizes = [1, 64], strides = [1, 1]} : vector<1x96xf32> to vector<1x64xf32>
    %145 = vector.extract_strided_slice %143 {offsets = [0, 0], sizes = [1, 64], strides = [1, 1]} : vector<1x96xf32> to vector<1x64xf32>
    %146 = arith.addf %144, %145 : vector<1x64xf32>
    %147 = arith.negf %146 : vector<1x64xf32>
    %148 = math.exp %147 : vector<1x64xf32>
    %cst_33 = arith.constant 1.000000e+00 : f32
    %149 = vector.broadcast %cst_33 : f32 to vector<1x64xf32>
    %150 = arith.addf %149, %148 : vector<1x64xf32>
    %151 = arith.divf %149, %150 : vector<1x64xf32>
    %152 = vector.extract_strided_slice %151 {offsets = [0, 0], sizes = [1, 32], strides = [1, 1]} : vector<1x64xf32> to vector<1x32xf32>
    %153 = vector.extract_strided_slice %151 {offsets = [0, 32], sizes = [1, 32], strides = [1, 1]} : vector<1x64xf32> to vector<1x32xf32>
    %154 = vector.extract_strided_slice %141 {offsets = [0, 64], sizes = [1, 32], strides = [1, 1]} : vector<1x96xf32> to vector<1x32xf32>
    %155 = vector.extract_strided_slice %143 {offsets = [0, 64], sizes = [1, 32], strides = [1, 1]} : vector<1x96xf32> to vector<1x32xf32>
    %156 = arith.addf %155, %12 : vector<1x32xf32>
    %157 = arith.mulf %152, %156 : vector<1x32xf32>
    %158 = arith.addf %154, %157 : vector<1x32xf32>
    %159 = math.tanh %158 : vector<1x32xf32>
    %cst_34 = arith.constant 1.000000e+00 : f32
    %160 = vector.broadcast %cst_34 : f32 to vector<1x32xf32>
    %161 = arith.subf %160, %153 : vector<1x32xf32>
    %162 = arith.mulf %161, %159 : vector<1x32xf32>
    %163 = arith.mulf %153, %140 : vector<1x32xf32>
    %164 = arith.addf %162, %163 : vector<1x32xf32>
    %165 = vector.extract_strided_slice %19 {offsets = [6, 0], sizes = [1, 96], strides = [1, 1]} : vector<8x96xf32> to vector<1x96xf32>
    %166 = arith.truncf %164 : vector<1x32xf32> to vector<1x32xbf16>
    %cst_35 = arith.constant dense<0.000000e+00> : vector<1x96xf32>
    %167 = tpu.matmul %166, %10, %cst_35 {dimension_numbers = #tpu.dot_dimension_numbers<[1], [0], [0], [1], [0, 0, 1, 1], [], []>} : vector<1x32xbf16>, vector<32x96xbf16>, vector<1x96xf32> -> vector<1x96xf32>
    %168 = vector.extract_strided_slice %165 {offsets = [0, 0], sizes = [1, 64], strides = [1, 1]} : vector<1x96xf32> to vector<1x64xf32>
    %169 = vector.extract_strided_slice %167 {offsets = [0, 0], sizes = [1, 64], strides = [1, 1]} : vector<1x96xf32> to vector<1x64xf32>
    %170 = arith.addf %168, %169 : vector<1x64xf32>
    %171 = arith.negf %170 : vector<1x64xf32>
    %172 = math.exp %171 : vector<1x64xf32>
    %cst_36 = arith.constant 1.000000e+00 : f32
    %173 = vector.broadcast %cst_36 : f32 to vector<1x64xf32>
    %174 = arith.addf %173, %172 : vector<1x64xf32>
    %175 = arith.divf %173, %174 : vector<1x64xf32>
    %176 = vector.extract_strided_slice %175 {offsets = [0, 0], sizes = [1, 32], strides = [1, 1]} : vector<1x64xf32> to vector<1x32xf32>
    %177 = vector.extract_strided_slice %175 {offsets = [0, 32], sizes = [1, 32], strides = [1, 1]} : vector<1x64xf32> to vector<1x32xf32>
    %178 = vector.extract_strided_slice %165 {offsets = [0, 64], sizes = [1, 32], strides = [1, 1]} : vector<1x96xf32> to vector<1x32xf32>
    %179 = vector.extract_strided_slice %167 {offsets = [0, 64], sizes = [1, 32], strides = [1, 1]} : vector<1x96xf32> to vector<1x32xf32>
    %180 = arith.addf %179, %12 : vector<1x32xf32>
    %181 = arith.mulf %176, %180 : vector<1x32xf32>
    %182 = arith.addf %178, %181 : vector<1x32xf32>
    %183 = math.tanh %182 : vector<1x32xf32>
    %cst_37 = arith.constant 1.000000e+00 : f32
    %184 = vector.broadcast %cst_37 : f32 to vector<1x32xf32>
    %185 = arith.subf %184, %177 : vector<1x32xf32>
    %186 = arith.mulf %185, %183 : vector<1x32xf32>
    %187 = arith.mulf %177, %164 : vector<1x32xf32>
    %188 = arith.addf %186, %187 : vector<1x32xf32>
    %189 = vector.extract_strided_slice %19 {offsets = [7, 0], sizes = [1, 96], strides = [1, 1]} : vector<8x96xf32> to vector<1x96xf32>
    %190 = arith.truncf %188 : vector<1x32xf32> to vector<1x32xbf16>
    %cst_38 = arith.constant dense<0.000000e+00> : vector<1x96xf32>
    %191 = tpu.matmul %190, %10, %cst_38 {dimension_numbers = #tpu.dot_dimension_numbers<[1], [0], [0], [1], [0, 0, 1, 1], [], []>} : vector<1x32xbf16>, vector<32x96xbf16>, vector<1x96xf32> -> vector<1x96xf32>
    %192 = vector.extract_strided_slice %189 {offsets = [0, 0], sizes = [1, 64], strides = [1, 1]} : vector<1x96xf32> to vector<1x64xf32>
    %193 = vector.extract_strided_slice %191 {offsets = [0, 0], sizes = [1, 64], strides = [1, 1]} : vector<1x96xf32> to vector<1x64xf32>
    %194 = arith.addf %192, %193 : vector<1x64xf32>
    %195 = arith.negf %194 : vector<1x64xf32>
    %196 = math.exp %195 : vector<1x64xf32>
    %cst_39 = arith.constant 1.000000e+00 : f32
    %197 = vector.broadcast %cst_39 : f32 to vector<1x64xf32>
    %198 = arith.addf %197, %196 : vector<1x64xf32>
    %199 = arith.divf %197, %198 : vector<1x64xf32>
    %200 = vector.extract_strided_slice %199 {offsets = [0, 0], sizes = [1, 32], strides = [1, 1]} : vector<1x64xf32> to vector<1x32xf32>
    %201 = vector.extract_strided_slice %199 {offsets = [0, 32], sizes = [1, 32], strides = [1, 1]} : vector<1x64xf32> to vector<1x32xf32>
    %202 = vector.extract_strided_slice %189 {offsets = [0, 64], sizes = [1, 32], strides = [1, 1]} : vector<1x96xf32> to vector<1x32xf32>
    %203 = vector.extract_strided_slice %191 {offsets = [0, 64], sizes = [1, 32], strides = [1, 1]} : vector<1x96xf32> to vector<1x32xf32>
    %204 = arith.addf %203, %12 : vector<1x32xf32>
    %205 = arith.mulf %200, %204 : vector<1x32xf32>
    %206 = arith.addf %202, %205 : vector<1x32xf32>
    %207 = math.tanh %206 : vector<1x32xf32>
    %cst_40 = arith.constant 1.000000e+00 : f32
    %208 = vector.broadcast %cst_40 : f32 to vector<1x32xf32>
    %209 = arith.subf %208, %201 : vector<1x32xf32>
    %210 = arith.mulf %209, %207 : vector<1x32xf32>
    %211 = arith.mulf %201, %188 : vector<1x32xf32>
    %212 = arith.addf %210, %211 : vector<1x32xf32>
    %213 = vector.shape_cast %212 : vector<1x32xf32> to vector<1x32xf32>
    %214 = vector.broadcast %213 : vector<1x32xf32> to vector<8x32xf32>
    %215 = tpu.concatenate %9, %214 in 1 : vector<8x32xf32>, vector<8x32xf32> -> vector<8x64xf32>
    %216 = arith.truncf %215 : vector<8x64xf32> to vector<8x64xbf16>
    %c0_41 = arith.constant 0 : index
    %c0_42 = arith.constant 0 : index
    %217 = vector.load %arg6[%c0_41, %c0_42] : memref<64x96xbf16, #tpu.memory_space<vmem>>, vector<64x96xbf16>
    %cst_43 = arith.constant dense<0.000000e+00> : vector<8x96xf32>
    %218 = tpu.matmul %216, %217, %cst_43 {dimension_numbers = #tpu.dot_dimension_numbers<[1], [0], [0], [1], [0, 0, 1, 1], [], []>} : vector<8x64xbf16>, vector<64x96xbf16>, vector<8x96xf32> -> vector<8x96xf32>
    %c0_44 = arith.constant 0 : index
    %c0_45 = arith.constant 0 : index
    %219 = vector.load %arg8[%c0_44, %c0_45] : memref<1x96xf32, #tpu.memory_space<vmem>>, vector<1x96xf32>
    %220 = vector.broadcast %219 : vector<1x96xf32> to vector<8x96xf32>
    %221 = arith.addf %218, %220 : vector<8x96xf32>
    %222 = vector.extract_strided_slice %221 {offsets = [0, 0], sizes = [1, 96], strides = [1, 1]} : vector<8x96xf32> to vector<1x96xf32>
    %223 = arith.truncf %212 : vector<1x32xf32> to vector<1x32xbf16>
    %cst_46 = arith.constant dense<0.000000e+00> : vector<1x96xf32>
    %224 = tpu.matmul %223, %11, %cst_46 {dimension_numbers = #tpu.dot_dimension_numbers<[1], [0], [0], [1], [0, 0, 1, 1], [], []>} : vector<1x32xbf16>, vector<32x96xbf16>, vector<1x96xf32> -> vector<1x96xf32>
    %225 = vector.extract_strided_slice %222 {offsets = [0, 0], sizes = [1, 64], strides = [1, 1]} : vector<1x96xf32> to vector<1x64xf32>
    %226 = vector.extract_strided_slice %224 {offsets = [0, 0], sizes = [1, 64], strides = [1, 1]} : vector<1x96xf32> to vector<1x64xf32>
    %227 = arith.addf %225, %226 : vector<1x64xf32>
    %228 = arith.negf %227 : vector<1x64xf32>
    %229 = math.exp %228 : vector<1x64xf32>
    %cst_47 = arith.constant 1.000000e+00 : f32
    %230 = vector.broadcast %cst_47 : f32 to vector<1x64xf32>
    %231 = arith.addf %230, %229 : vector<1x64xf32>
    %232 = arith.divf %230, %231 : vector<1x64xf32>
    %233 = vector.extract_strided_slice %232 {offsets = [0, 0], sizes = [1, 32], strides = [1, 1]} : vector<1x64xf32> to vector<1x32xf32>
    %234 = vector.extract_strided_slice %232 {offsets = [0, 32], sizes = [1, 32], strides = [1, 1]} : vector<1x64xf32> to vector<1x32xf32>
    %235 = vector.extract_strided_slice %222 {offsets = [0, 64], sizes = [1, 32], strides = [1, 1]} : vector<1x96xf32> to vector<1x32xf32>
    %236 = vector.extract_strided_slice %224 {offsets = [0, 64], sizes = [1, 32], strides = [1, 1]} : vector<1x96xf32> to vector<1x32xf32>
    %237 = arith.addf %236, %13 : vector<1x32xf32>
    %238 = arith.mulf %233, %237 : vector<1x32xf32>
    %239 = arith.addf %235, %238 : vector<1x32xf32>
    %240 = math.tanh %239 : vector<1x32xf32>
    %cst_48 = arith.constant 1.000000e+00 : f32
    %241 = vector.broadcast %cst_48 : f32 to vector<1x32xf32>
    %242 = arith.subf %241, %234 : vector<1x32xf32>
    %243 = arith.mulf %242, %240 : vector<1x32xf32>
    %244 = arith.mulf %234, %212 : vector<1x32xf32>
    %245 = arith.addf %243, %244 : vector<1x32xf32>
    %246 = vector.extract_strided_slice %221 {offsets = [1, 0], sizes = [1, 96], strides = [1, 1]} : vector<8x96xf32> to vector<1x96xf32>
    %247 = arith.truncf %245 : vector<1x32xf32> to vector<1x32xbf16>
    %cst_49 = arith.constant dense<0.000000e+00> : vector<1x96xf32>
    %248 = tpu.matmul %247, %11, %cst_49 {dimension_numbers = #tpu.dot_dimension_numbers<[1], [0], [0], [1], [0, 0, 1, 1], [], []>} : vector<1x32xbf16>, vector<32x96xbf16>, vector<1x96xf32> -> vector<1x96xf32>
    %249 = vector.extract_strided_slice %246 {offsets = [0, 0], sizes = [1, 64], strides = [1, 1]} : vector<1x96xf32> to vector<1x64xf32>
    %250 = vector.extract_strided_slice %248 {offsets = [0, 0], sizes = [1, 64], strides = [1, 1]} : vector<1x96xf32> to vector<1x64xf32>
    %251 = arith.addf %249, %250 : vector<1x64xf32>
    %252 = arith.negf %251 : vector<1x64xf32>
    %253 = math.exp %252 : vector<1x64xf32>
    %cst_50 = arith.constant 1.000000e+00 : f32
    %254 = vector.broadcast %cst_50 : f32 to vector<1x64xf32>
    %255 = arith.addf %254, %253 : vector<1x64xf32>
    %256 = arith.divf %254, %255 : vector<1x64xf32>
    %257 = vector.extract_strided_slice %256 {offsets = [0, 0], sizes = [1, 32], strides = [1, 1]} : vector<1x64xf32> to vector<1x32xf32>
    %258 = vector.extract_strided_slice %256 {offsets = [0, 32], sizes = [1, 32], strides = [1, 1]} : vector<1x64xf32> to vector<1x32xf32>
    %259 = vector.extract_strided_slice %246 {offsets = [0, 64], sizes = [1, 32], strides = [1, 1]} : vector<1x96xf32> to vector<1x32xf32>
    %260 = vector.extract_strided_slice %248 {offsets = [0, 64], sizes = [1, 32], strides = [1, 1]} : vector<1x96xf32> to vector<1x32xf32>
    %261 = arith.addf %260, %13 : vector<1x32xf32>
    %262 = arith.mulf %257, %261 : vector<1x32xf32>
    %263 = arith.addf %259, %262 : vector<1x32xf32>
    %264 = math.tanh %263 : vector<1x32xf32>
    %cst_51 = arith.constant 1.000000e+00 : f32
    %265 = vector.broadcast %cst_51 : f32 to vector<1x32xf32>
    %266 = arith.subf %265, %258 : vector<1x32xf32>
    %267 = arith.mulf %266, %264 : vector<1x32xf32>
    %268 = arith.mulf %258, %245 : vector<1x32xf32>
    %269 = arith.addf %267, %268 : vector<1x32xf32>
    %270 = vector.extract_strided_slice %221 {offsets = [2, 0], sizes = [1, 96], strides = [1, 1]} : vector<8x96xf32> to vector<1x96xf32>
    %271 = arith.truncf %269 : vector<1x32xf32> to vector<1x32xbf16>
    %cst_52 = arith.constant dense<0.000000e+00> : vector<1x96xf32>
    %272 = tpu.matmul %271, %11, %cst_52 {dimension_numbers = #tpu.dot_dimension_numbers<[1], [0], [0], [1], [0, 0, 1, 1], [], []>} : vector<1x32xbf16>, vector<32x96xbf16>, vector<1x96xf32> -> vector<1x96xf32>
    %273 = vector.extract_strided_slice %270 {offsets = [0, 0], sizes = [1, 64], strides = [1, 1]} : vector<1x96xf32> to vector<1x64xf32>
    %274 = vector.extract_strided_slice %272 {offsets = [0, 0], sizes = [1, 64], strides = [1, 1]} : vector<1x96xf32> to vector<1x64xf32>
    %275 = arith.addf %273, %274 : vector<1x64xf32>
    %276 = arith.negf %275 : vector<1x64xf32>
    %277 = math.exp %276 : vector<1x64xf32>
    %cst_53 = arith.constant 1.000000e+00 : f32
    %278 = vector.broadcast %cst_53 : f32 to vector<1x64xf32>
    %279 = arith.addf %278, %277 : vector<1x64xf32>
    %280 = arith.divf %278, %279 : vector<1x64xf32>
    %281 = vector.extract_strided_slice %280 {offsets = [0, 0], sizes = [1, 32], strides = [1, 1]} : vector<1x64xf32> to vector<1x32xf32>
    %282 = vector.extract_strided_slice %280 {offsets = [0, 32], sizes = [1, 32], strides = [1, 1]} : vector<1x64xf32> to vector<1x32xf32>
    %283 = vector.extract_strided_slice %270 {offsets = [0, 64], sizes = [1, 32], strides = [1, 1]} : vector<1x96xf32> to vector<1x32xf32>
    %284 = vector.extract_strided_slice %272 {offsets = [0, 64], sizes = [1, 32], strides = [1, 1]} : vector<1x96xf32> to vector<1x32xf32>
    %285 = arith.addf %284, %13 : vector<1x32xf32>
    %286 = arith.mulf %281, %285 : vector<1x32xf32>
    %287 = arith.addf %283, %286 : vector<1x32xf32>
    %288 = math.tanh %287 : vector<1x32xf32>
    %cst_54 = arith.constant 1.000000e+00 : f32
    %289 = vector.broadcast %cst_54 : f32 to vector<1x32xf32>
    %290 = arith.subf %289, %282 : vector<1x32xf32>
    %291 = arith.mulf %290, %288 : vector<1x32xf32>
    %292 = arith.mulf %282, %269 : vector<1x32xf32>
    %293 = arith.addf %291, %292 : vector<1x32xf32>
    %294 = vector.extract_strided_slice %221 {offsets = [3, 0], sizes = [1, 96], strides = [1, 1]} : vector<8x96xf32> to vector<1x96xf32>
    %295 = arith.truncf %293 : vector<1x32xf32> to vector<1x32xbf16>
    %cst_55 = arith.constant dense<0.000000e+00> : vector<1x96xf32>
    %296 = tpu.matmul %295, %11, %cst_55 {dimension_numbers = #tpu.dot_dimension_numbers<[1], [0], [0], [1], [0, 0, 1, 1], [], []>} : vector<1x32xbf16>, vector<32x96xbf16>, vector<1x96xf32> -> vector<1x96xf32>
    %297 = vector.extract_strided_slice %294 {offsets = [0, 0], sizes = [1, 64], strides = [1, 1]} : vector<1x96xf32> to vector<1x64xf32>
    %298 = vector.extract_strided_slice %296 {offsets = [0, 0], sizes = [1, 64], strides = [1, 1]} : vector<1x96xf32> to vector<1x64xf32>
    %299 = arith.addf %297, %298 : vector<1x64xf32>
    %300 = arith.negf %299 : vector<1x64xf32>
    %301 = math.exp %300 : vector<1x64xf32>
    %cst_56 = arith.constant 1.000000e+00 : f32
    %302 = vector.broadcast %cst_56 : f32 to vector<1x64xf32>
    %303 = arith.addf %302, %301 : vector<1x64xf32>
    %304 = arith.divf %302, %303 : vector<1x64xf32>
    %305 = vector.extract_strided_slice %304 {offsets = [0, 0], sizes = [1, 32], strides = [1, 1]} : vector<1x64xf32> to vector<1x32xf32>
    %306 = vector.extract_strided_slice %304 {offsets = [0, 32], sizes = [1, 32], strides = [1, 1]} : vector<1x64xf32> to vector<1x32xf32>
    %307 = vector.extract_strided_slice %294 {offsets = [0, 64], sizes = [1, 32], strides = [1, 1]} : vector<1x96xf32> to vector<1x32xf32>
    %308 = vector.extract_strided_slice %296 {offsets = [0, 64], sizes = [1, 32], strides = [1, 1]} : vector<1x96xf32> to vector<1x32xf32>
    %309 = arith.addf %308, %13 : vector<1x32xf32>
    %310 = arith.mulf %305, %309 : vector<1x32xf32>
    %311 = arith.addf %307, %310 : vector<1x32xf32>
    %312 = math.tanh %311 : vector<1x32xf32>
    %cst_57 = arith.constant 1.000000e+00 : f32
    %313 = vector.broadcast %cst_57 : f32 to vector<1x32xf32>
    %314 = arith.subf %313, %306 : vector<1x32xf32>
    %315 = arith.mulf %314, %312 : vector<1x32xf32>
    %316 = arith.mulf %306, %293 : vector<1x32xf32>
    %317 = arith.addf %315, %316 : vector<1x32xf32>
    %318 = vector.extract_strided_slice %221 {offsets = [4, 0], sizes = [1, 96], strides = [1, 1]} : vector<8x96xf32> to vector<1x96xf32>
    %319 = arith.truncf %317 : vector<1x32xf32> to vector<1x32xbf16>
    %cst_58 = arith.constant dense<0.000000e+00> : vector<1x96xf32>
    %320 = tpu.matmul %319, %11, %cst_58 {dimension_numbers = #tpu.dot_dimension_numbers<[1], [0], [0], [1], [0, 0, 1, 1], [], []>} : vector<1x32xbf16>, vector<32x96xbf16>, vector<1x96xf32> -> vector<1x96xf32>
    %321 = vector.extract_strided_slice %318 {offsets = [0, 0], sizes = [1, 64], strides = [1, 1]} : vector<1x96xf32> to vector<1x64xf32>
    %322 = vector.extract_strided_slice %320 {offsets = [0, 0], sizes = [1, 64], strides = [1, 1]} : vector<1x96xf32> to vector<1x64xf32>
    %323 = arith.addf %321, %322 : vector<1x64xf32>
    %324 = arith.negf %323 : vector<1x64xf32>
    %325 = math.exp %324 : vector<1x64xf32>
    %cst_59 = arith.constant 1.000000e+00 : f32
    %326 = vector.broadcast %cst_59 : f32 to vector<1x64xf32>
    %327 = arith.addf %326, %325 : vector<1x64xf32>
    %328 = arith.divf %326, %327 : vector<1x64xf32>
    %329 = vector.extract_strided_slice %328 {offsets = [0, 0], sizes = [1, 32], strides = [1, 1]} : vector<1x64xf32> to vector<1x32xf32>
    %330 = vector.extract_strided_slice %328 {offsets = [0, 32], sizes = [1, 32], strides = [1, 1]} : vector<1x64xf32> to vector<1x32xf32>
    %331 = vector.extract_strided_slice %318 {offsets = [0, 64], sizes = [1, 32], strides = [1, 1]} : vector<1x96xf32> to vector<1x32xf32>
    %332 = vector.extract_strided_slice %320 {offsets = [0, 64], sizes = [1, 32], strides = [1, 1]} : vector<1x96xf32> to vector<1x32xf32>
    %333 = arith.addf %332, %13 : vector<1x32xf32>
    %334 = arith.mulf %329, %333 : vector<1x32xf32>
    %335 = arith.addf %331, %334 : vector<1x32xf32>
    %336 = math.tanh %335 : vector<1x32xf32>
    %cst_60 = arith.constant 1.000000e+00 : f32
    %337 = vector.broadcast %cst_60 : f32 to vector<1x32xf32>
    %338 = arith.subf %337, %330 : vector<1x32xf32>
    %339 = arith.mulf %338, %336 : vector<1x32xf32>
    %340 = arith.mulf %330, %317 : vector<1x32xf32>
    %341 = arith.addf %339, %340 : vector<1x32xf32>
    %342 = vector.extract_strided_slice %221 {offsets = [5, 0], sizes = [1, 96], strides = [1, 1]} : vector<8x96xf32> to vector<1x96xf32>
    %343 = arith.truncf %341 : vector<1x32xf32> to vector<1x32xbf16>
    %cst_61 = arith.constant dense<0.000000e+00> : vector<1x96xf32>
    %344 = tpu.matmul %343, %11, %cst_61 {dimension_numbers = #tpu.dot_dimension_numbers<[1], [0], [0], [1], [0, 0, 1, 1], [], []>} : vector<1x32xbf16>, vector<32x96xbf16>, vector<1x96xf32> -> vector<1x96xf32>
    %345 = vector.extract_strided_slice %342 {offsets = [0, 0], sizes = [1, 64], strides = [1, 1]} : vector<1x96xf32> to vector<1x64xf32>
    %346 = vector.extract_strided_slice %344 {offsets = [0, 0], sizes = [1, 64], strides = [1, 1]} : vector<1x96xf32> to vector<1x64xf32>
    %347 = arith.addf %345, %346 : vector<1x64xf32>
    %348 = arith.negf %347 : vector<1x64xf32>
    %349 = math.exp %348 : vector<1x64xf32>
    %cst_62 = arith.constant 1.000000e+00 : f32
    %350 = vector.broadcast %cst_62 : f32 to vector<1x64xf32>
    %351 = arith.addf %350, %349 : vector<1x64xf32>
    %352 = arith.divf %350, %351 : vector<1x64xf32>
    %353 = vector.extract_strided_slice %352 {offsets = [0, 0], sizes = [1, 32], strides = [1, 1]} : vector<1x64xf32> to vector<1x32xf32>
    %354 = vector.extract_strided_slice %352 {offsets = [0, 32], sizes = [1, 32], strides = [1, 1]} : vector<1x64xf32> to vector<1x32xf32>
    %355 = vector.extract_strided_slice %342 {offsets = [0, 64], sizes = [1, 32], strides = [1, 1]} : vector<1x96xf32> to vector<1x32xf32>
    %356 = vector.extract_strided_slice %344 {offsets = [0, 64], sizes = [1, 32], strides = [1, 1]} : vector<1x96xf32> to vector<1x32xf32>
    %357 = arith.addf %356, %13 : vector<1x32xf32>
    %358 = arith.mulf %353, %357 : vector<1x32xf32>
    %359 = arith.addf %355, %358 : vector<1x32xf32>
    %360 = math.tanh %359 : vector<1x32xf32>
    %cst_63 = arith.constant 1.000000e+00 : f32
    %361 = vector.broadcast %cst_63 : f32 to vector<1x32xf32>
    %362 = arith.subf %361, %354 : vector<1x32xf32>
    %363 = arith.mulf %362, %360 : vector<1x32xf32>
    %364 = arith.mulf %354, %341 : vector<1x32xf32>
    %365 = arith.addf %363, %364 : vector<1x32xf32>
    %366 = vector.extract_strided_slice %221 {offsets = [6, 0], sizes = [1, 96], strides = [1, 1]} : vector<8x96xf32> to vector<1x96xf32>
    %367 = arith.truncf %365 : vector<1x32xf32> to vector<1x32xbf16>
    %cst_64 = arith.constant dense<0.000000e+00> : vector<1x96xf32>
    %368 = tpu.matmul %367, %11, %cst_64 {dimension_numbers = #tpu.dot_dimension_numbers<[1], [0], [0], [1], [0, 0, 1, 1], [], []>} : vector<1x32xbf16>, vector<32x96xbf16>, vector<1x96xf32> -> vector<1x96xf32>
    %369 = vector.extract_strided_slice %366 {offsets = [0, 0], sizes = [1, 64], strides = [1, 1]} : vector<1x96xf32> to vector<1x64xf32>
    %370 = vector.extract_strided_slice %368 {offsets = [0, 0], sizes = [1, 64], strides = [1, 1]} : vector<1x96xf32> to vector<1x64xf32>
    %371 = arith.addf %369, %370 : vector<1x64xf32>
    %372 = arith.negf %371 : vector<1x64xf32>
    %373 = math.exp %372 : vector<1x64xf32>
    %cst_65 = arith.constant 1.000000e+00 : f32
    %374 = vector.broadcast %cst_65 : f32 to vector<1x64xf32>
    %375 = arith.addf %374, %373 : vector<1x64xf32>
    %376 = arith.divf %374, %375 : vector<1x64xf32>
    %377 = vector.extract_strided_slice %376 {offsets = [0, 0], sizes = [1, 32], strides = [1, 1]} : vector<1x64xf32> to vector<1x32xf32>
    %378 = vector.extract_strided_slice %376 {offsets = [0, 32], sizes = [1, 32], strides = [1, 1]} : vector<1x64xf32> to vector<1x32xf32>
    %379 = vector.extract_strided_slice %366 {offsets = [0, 64], sizes = [1, 32], strides = [1, 1]} : vector<1x96xf32> to vector<1x32xf32>
    %380 = vector.extract_strided_slice %368 {offsets = [0, 64], sizes = [1, 32], strides = [1, 1]} : vector<1x96xf32> to vector<1x32xf32>
    %381 = arith.addf %380, %13 : vector<1x32xf32>
    %382 = arith.mulf %377, %381 : vector<1x32xf32>
    %383 = arith.addf %379, %382 : vector<1x32xf32>
    %384 = math.tanh %383 : vector<1x32xf32>
    %cst_66 = arith.constant 1.000000e+00 : f32
    %385 = vector.broadcast %cst_66 : f32 to vector<1x32xf32>
    %386 = arith.subf %385, %378 : vector<1x32xf32>
    %387 = arith.mulf %386, %384 : vector<1x32xf32>
    %388 = arith.mulf %378, %365 : vector<1x32xf32>
    %389 = arith.addf %387, %388 : vector<1x32xf32>
    %390 = vector.extract_strided_slice %221 {offsets = [7, 0], sizes = [1, 96], strides = [1, 1]} : vector<8x96xf32> to vector<1x96xf32>
    %391 = arith.truncf %389 : vector<1x32xf32> to vector<1x32xbf16>
    %cst_67 = arith.constant dense<0.000000e+00> : vector<1x96xf32>
    %392 = tpu.matmul %391, %11, %cst_67 {dimension_numbers = #tpu.dot_dimension_numbers<[1], [0], [0], [1], [0, 0, 1, 1], [], []>} : vector<1x32xbf16>, vector<32x96xbf16>, vector<1x96xf32> -> vector<1x96xf32>
    %393 = vector.extract_strided_slice %390 {offsets = [0, 0], sizes = [1, 64], strides = [1, 1]} : vector<1x96xf32> to vector<1x64xf32>
    %394 = vector.extract_strided_slice %392 {offsets = [0, 0], sizes = [1, 64], strides = [1, 1]} : vector<1x96xf32> to vector<1x64xf32>
    %395 = arith.addf %393, %394 : vector<1x64xf32>
    %396 = arith.negf %395 : vector<1x64xf32>
    %397 = math.exp %396 : vector<1x64xf32>
    %cst_68 = arith.constant 1.000000e+00 : f32
    %398 = vector.broadcast %cst_68 : f32 to vector<1x64xf32>
    %399 = arith.addf %398, %397 : vector<1x64xf32>
    %400 = arith.divf %398, %399 : vector<1x64xf32>
    %401 = vector.extract_strided_slice %400 {offsets = [0, 0], sizes = [1, 32], strides = [1, 1]} : vector<1x64xf32> to vector<1x32xf32>
    %402 = vector.extract_strided_slice %400 {offsets = [0, 32], sizes = [1, 32], strides = [1, 1]} : vector<1x64xf32> to vector<1x32xf32>
    %403 = vector.extract_strided_slice %390 {offsets = [0, 64], sizes = [1, 32], strides = [1, 1]} : vector<1x96xf32> to vector<1x32xf32>
    %404 = vector.extract_strided_slice %392 {offsets = [0, 64], sizes = [1, 32], strides = [1, 1]} : vector<1x96xf32> to vector<1x32xf32>
    %405 = arith.addf %404, %13 : vector<1x32xf32>
    %406 = arith.mulf %401, %405 : vector<1x32xf32>
    %407 = arith.addf %403, %406 : vector<1x32xf32>
    %408 = math.tanh %407 : vector<1x32xf32>
    %cst_69 = arith.constant 1.000000e+00 : f32
    %409 = vector.broadcast %cst_69 : f32 to vector<1x32xf32>
    %410 = arith.subf %409, %402 : vector<1x32xf32>
    %411 = arith.mulf %410, %408 : vector<1x32xf32>
    %412 = arith.mulf %402, %389 : vector<1x32xf32>
    %413 = arith.addf %411, %412 : vector<1x32xf32>
    %414 = tpu.concatenate %245, %269, %293, %317, %341, %365, %389, %413 in 0 : vector<1x32xf32>, vector<1x32xf32>, vector<1x32xf32>, vector<1x32xf32>, vector<1x32xf32>, vector<1x32xf32>, vector<1x32xf32>, vector<1x32xf32> -> vector<8x32xf32>
    %415 = arith.truncf %414 : vector<8x32xf32> to vector<8x32xbf16>
    %c0_70 = arith.constant 0 : index
    %c0_71 = arith.constant 0 : index
    %416 = vector.load %arg10[%c0_70, %c0_71] : memref<32x256xbf16, #tpu.memory_space<vmem>>, vector<32x256xbf16>
    %cst_72 = arith.constant dense<0.000000e+00> : vector<8x256xf32>
    %417 = tpu.matmul %415, %416, %cst_72 {dimension_numbers = #tpu.dot_dimension_numbers<[1], [0], [0], [1], [0, 0, 1, 1], [], []>} : vector<8x32xbf16>, vector<32x256xbf16>, vector<8x256xf32> -> vector<8x256xf32>
    %c0_73 = arith.constant 0 : index
    %c0_74 = arith.constant 0 : index
    %418 = vector.load %arg11[%c0_73, %c0_74] : memref<1x256xf32, #tpu.memory_space<vmem>>, vector<1x256xf32>
    %419 = vector.broadcast %418 : vector<1x256xf32> to vector<8x256xf32>
    %420 = arith.addf %417, %419 : vector<8x256xf32>
    %c0_75 = arith.constant 0 : index
    %c0_76 = arith.constant 0 : index
    %421 = vector.load %arg12[%c0_75, %c0_76] : memref<8x256xf32, #tpu.memory_space<vmem>>, vector<8x256xf32>
    tpu.vector_store %arg12[%c0_75, %c0_76], %420 {strides = array<i32>} : memref<8x256xf32, #tpu.memory_space<vmem>>, vector<8x256xf32>,
    return
  }
}

</mosaic_0001>

<llo_original>
// kernel: seq2seq_gru_forward.1
$region0: #{seq2seq_gru_forward.1}
  #allocation0 [shape = 'u32[]', space=smem, size = 0x4, offset = 0x4, fixed_abs, tag = 'smem constant byte address 0x4 - core index']
  #allocation1 [shape = 'u32[144,128]{1,0:T(1,128)}', space=vmem, size = 0x12000, scoped, tag = 'internal scratch']
  %s0 = inlined_call_operand.vmem [shape: s32[16,1], index: 0, kind: input, shape index: {}]
  %s1 = inlined_call_operand.vmem [shape: f32[256,32], index: 1, kind: input, shape index: {}]
  %s2 = inlined_call_operand.vmem [shape: bf16[32,96], index: 2, kind: input, shape index: {}]
  %s3 = inlined_call_operand.vmem [shape: bf16[32,96], index: 3, kind: input, shape index: {}]
  %s4 = inlined_call_operand.vmem [shape: f32[1,96], index: 4, kind: input, shape index: {}]
  %s5 = inlined_call_operand.vmem [shape: f32[1,32], index: 5, kind: input, shape index: {}]
  %s6 = inlined_call_operand.vmem [shape: bf16[64,96], index: 6, kind: input, shape index: {}]
  %s7 = inlined_call_operand.vmem [shape: bf16[32,96], index: 7, kind: input, shape index: {}]
  %s8 = inlined_call_operand.vmem [shape: f32[1,96], index: 8, kind: input, shape index: {}]
  %s9 = inlined_call_operand.vmem [shape: f32[1,32], index: 9, kind: input, shape index: {}]
  %s10 = inlined_call_operand.vmem [shape: bf16[32,256], index: 10, kind: input, shape index: {}]
  %s11 = inlined_call_operand.vmem [shape: f32[1,256], index: 11, kind: input, shape index: {}]
  %s12 = inlined_call_operand.hbm [shape: f32[8,256], index: 12, kind: output, shape index: {}]
  %s13 = sld [smem:[#allocation0]]
  $region58: #{seq2seq_gru_forward.1} parent=0
    _
  %s15 = ssub.s32 1, %s13
  %s16 = scalar_select 0, %s15, %s13
  $region1: #{seq2seq_gru_forward.1} parent=0
    #allocation2 [shape = 'u8[8192]{0}', space=vmem, size = 0x2000, scoped, tag = 'output window, operand 0, single buffered']
    #allocation3 [shape = 's32[1]{0}', space=sflag, size = 0x4, scoped, tag = 'scoped memory for seq2seq_gru_forward.1']
    %17 = vsyncpa [#allocation3], 0
    // Predicated region
    $region2: #{seq2seq_gru_forward.1} parent=1 // pred_check
      _
    $region3: #{seq2seq_gru_forward.1} parent=1 // pred_check_branch
      %19 = sbr.rel (0) target = $region5
    $region4: #{seq2seq_gru_forward.1} parent=1 // pred_region
      _
    $region5: #{seq2seq_gru_forward.1} parent=1 // pred_fallthru
      _
    // Predicated region
    $region6: #{seq2seq_gru_forward.1} parent=1 // pred_check
      _
    $region7: #{seq2seq_gru_forward.1} parent=1 // pred_check_branch
      %21 = sbr.rel (0) target = $region9
    $region8: #{seq2seq_gru_forward.1} parent=1 // pred_region
      _
    $region9: #{seq2seq_gru_forward.1} parent=1 // pred_fallthru
      _
    // Predicated region
    $region10: #{seq2seq_gru_forward.1} parent=1 // pred_check
      _
    $region11: #{seq2seq_gru_forward.1} parent=1 // pred_check_branch
      %23 = sbr.rel (0) target = $region13
    $region12: #{seq2seq_gru_forward.1} parent=1 // pred_region
      _
    $region13: #{seq2seq_gru_forward.1} parent=1 // pred_fallthru
      _
    // Predicated region
    $region14: #{seq2seq_gru_forward.1} parent=1 // pred_check
      _
    $region15: #{seq2seq_gru_forward.1} parent=1 // pred_check_branch
      %25 = sbr.rel (0) target = $region17
    $region16: #{seq2seq_gru_forward.1} parent=1 // pred_region
      _
    $region17: #{seq2seq_gru_forward.1} parent=1 // pred_fallthru
      _
    // Predicated region
    $region18: #{seq2seq_gru_forward.1} parent=1 // pred_check
      _
    $region19: #{seq2seq_gru_forward.1} parent=1 // pred_check_branch
      %27 = sbr.rel (0) target = $region21
    $region20: #{seq2seq_gru_forward.1} parent=1 // pred_region
      _
    $region21: #{seq2seq_gru_forward.1} parent=1 // pred_fallthru
      _
    // Predicated region
    $region22: #{seq2seq_gru_forward.1} parent=1 // pred_check
      _
    $region23: #{seq2seq_gru_forward.1} parent=1 // pred_check_branch
      %29 = sbr.rel (0) target = $region25
    $region24: #{seq2seq_gru_forward.1} parent=1 // pred_region
      _
    $region25: #{seq2seq_gru_forward.1} parent=1 // pred_fallthru
      _
    // Predicated region
    $region26: #{seq2seq_gru_forward.1} parent=1 // pred_check
      _
    $region27: #{seq2seq_gru_forward.1} parent=1 // pred_check_branch
      %31 = sbr.rel (0) target = $region29
    $region28: #{seq2seq_gru_forward.1} parent=1 // pred_region
      _
    $region29: #{seq2seq_gru_forward.1} parent=1 // pred_fallthru
      _
    // Predicated region
    $region30: #{seq2seq_gru_forward.1} parent=1 // pred_check
      _
    $region31: #{seq2seq_gru_forward.1} parent=1 // pred_check_branch
      %33 = sbr.rel (0) target = $region33
    $region32: #{seq2seq_gru_forward.1} parent=1 // pred_region
      _
    $region33: #{seq2seq_gru_forward.1} parent=1 // pred_fallthru
      _
    // Predicated region
    $region34: #{seq2seq_gru_forward.1} parent=1 // pred_check
      _
    $region35: #{seq2seq_gru_forward.1} parent=1 // pred_check_branch
      %35 = sbr.rel (0) target = $region37
    $region36: #{seq2seq_gru_forward.1} parent=1 // pred_region
      _
    $region37: #{seq2seq_gru_forward.1} parent=1 // pred_fallthru
      _
    // Predicated region
    $region38: #{seq2seq_gru_forward.1} parent=1 // pred_check
      _
    $region39: #{seq2seq_gru_forward.1} parent=1 // pred_check_branch
      %37 = sbr.rel (0) target = $region41
    $region40: #{seq2seq_gru_forward.1} parent=1 // pred_region
      _
    $region41: #{seq2seq_gru_forward.1} parent=1 // pred_fallthru
      _
    // Predicated region
    $region42: #{seq2seq_gru_forward.1} parent=1 // pred_check
      _
    $region43: #{seq2seq_gru_forward.1} parent=1 // pred_check_branch
      %39 = sbr.rel (0) target = $region45
    $region44: #{seq2seq_gru_forward.1} parent=1 // pred_region
      _
    $region45: #{seq2seq_gru_forward.1} parent=1 // pred_fallthru
      _
    // Predicated region
    $region46: #{seq2seq_gru_forward.1} parent=1 // pred_check
      _
    $region47: #{seq2seq_gru_forward.1} parent=1 // pred_check_branch
      %41 = sbr.rel (0) target = $region49
    $region48: #{seq2seq_gru_forward.1} parent=1 // pred_region
      _
    $region49: #{seq2seq_gru_forward.1} parent=1 // pred_fallthru
      _
    %v43 = vld [vmem:[%s0] sm:$0xff]
    %v44 = vld [vmem:[%s0 + $0x8] sm:$0xff]
    %v45 = vlaneseq
    %v46 = vand.u32 %v45, 127
    %v47 = vadd.s32 %v46, 128
    %48 = vset.pattern.permute.xlu0 0
    %49 = vperm.xlu0 %48, %v43
    %v50 = vpop.permute.xlu0 %49
    %51 = vset.pattern.permute.xlu0 0
    %52 = vperm.xlu0 %51, %v44
    %v53 = vpop.permute.xlu0 %52
    %vm54 = vcmp.eq.s32.totalorder %v50, %v46
    %vm55 = vcmp.eq.s32.totalorder %v50, %v47
    %vm56 = vcmp.eq.s32.totalorder %v53, %v46
    %vm57 = vcmp.eq.s32.totalorder %v53, %v47
    %v58 = vsel %vm54, 1, 0
    %v59 = vsel %vm55, 1, 0
    %v60 = vsel %vm56, 1, 0
    %v61 = vsel %vm57, 1, 0
    %v62 = vcvt.s32.f32 %v58
    %v63 = vcvt.s32.f32 %v59
    %v64 = vcvt.s32.f32 %v60
    %v65 = vcvt.s32.f32 %v61
    %v66 = vld [vmem:[%s1] sm:$0xff]
    %v67 = vld [vmem:[%s1 + $0x8] sm:$0xff]
    %v68 = vld [vmem:[%s1 + $0x10] sm:$0xff]
    %v69 = vld [vmem:[%s1 + $0x18] sm:$0xff]
    %v70 = vld [vmem:[%s1 + $0x20] sm:$0xff]
    %v71 = vld [vmem:[%s1 + $0x28] sm:$0xff]
    %v72 = vld [vmem:[%s1 + $0x30] sm:$0xff]
    %v73 = vld [vmem:[%s1 + $0x38] sm:$0xff]
    %v74 = vld [vmem:[%s1 + $0x40] sm:$0xff]
    %v75 = vld [vmem:[%s1 + $0x48] sm:$0xff]
    %v76 = vld [vmem:[%s1 + $0x50] sm:$0xff]
    %v77 = vld [vmem:[%s1 + $0x58] sm:$0xff]
    %v78 = vld [vmem:[%s1 + $0x60] sm:$0xff]
    %v79 = vld [vmem:[%s1 + $0x68] sm:$0xff]
    %v80 = vld [vmem:[%s1 + $0x70] sm:$0xff]
    %v81 = vld [vmem:[%s1 + $0x78] sm:$0xff]
    %v82 = vld [vmem:[%s1 + $0x80] sm:$0xff]
    %v83 = vld [vmem:[%s1 + $0x88] sm:$0xff]
    %v84 = vld [vmem:[%s1 + $0x90] sm:$0xff]
    %v85 = vld [vmem:[%s1 + $0x98] sm:$0xff]
    %v86 = vld [vmem:[%s1 + $0xa0] sm:$0xff]
    %v87 = vld [vmem:[%s1 + $0xa8] sm:$0xff]
    %v88 = vld [vmem:[%s1 + $0xb0] sm:$0xff]
    %v89 = vld [vmem:[%s1 + $0xb8] sm:$0xff]
    %v90 = vld [vmem:[%s1 + $0xc0] sm:$0xff]
    %v91 = vld [vmem:[%s1 + $0xc8] sm:$0xff]
    %v92 = vld [vmem:[%s1 + $0xd0] sm:$0xff]
    %v93 = vld [vmem:[%s1 + $0xd8] sm:$0xff]
    %v94 = vld [vmem:[%s1 + $0xe0] sm:$0xff]
    %v95 = vld [vmem:[%s1 + $0xe8] sm:$0xff]
    %v96 = vld [vmem:[%s1 + $0xf0] sm:$0xff]
    %v97 = vld [vmem:[%s1 + $0xf8] sm:$0xff]
    %98 = vmatprep.subr.mxu0 0.0
    %99 = vmatpush1.msra.mxu0 %v66
    %100 = vmatprep.subr.mxu0 0.0
    %101 = vmatpush1.msra.mxu0 %v67
    %102 = vmatprep.subr.mxu0 0.0
    %103 = vmatpush1.msra.mxu0 %v68
    %104 = vmatprep.subr.mxu0 0.0
    %105 = vmatpush1.msra.mxu0 %v69
    %106 = vmatprep.subr.mxu0 0.0
    %107 = vmatpush1.msra.mxu0 %v70
    %108 = vmatprep.subr.mxu0 0.0
    %109 = vmatpush1.msra.mxu0 %v71
    %110 = vmatprep.subr.mxu0 0.0
    %111 = vmatpush1.msra.mxu0 %v72
    %112 = vmatprep.subr.mxu0 0.0
    %113 = vmatpush1.msra.mxu0 %v73
    %114 = vmatprep.subr.mxu0 0.0
    %115 = vmatpush1.msra.mxu0 %v74
    %116 = vmatprep.subr.mxu0 0.0
    %117 = vmatpush1.msra.mxu0 %v75
    %118 = vmatprep.subr.mxu0 0.0
    %119 = vmatpush1.msra.mxu0 %v76
    %120 = vmatprep.subr.mxu0 0.0
    %121 = vmatpush1.msra.mxu0 %v77
    %122 = vmatprep.subr.mxu0 0.0
    %123 = vmatpush1.msra.mxu0 %v78
    %124 = vmatprep.subr.mxu0 0.0
    %125 = vmatpush1.msra.mxu0 %v79
    %126 = vmatprep.subr.mxu0 0.0
    %127 = vmatpush1.msra.mxu0 %v80
    %128 = vmatprep.subr.mxu0 0.0
    %129 = vmatpush1.msra.mxu0 %v81
    %130 = vmatprep.subr.mxu0 0.0
    %131 = vmatpush1.msra.mxu0 %v82
    %132 = vmatprep.subr.mxu0 0.0
    %133 = vmatpush1.msra.mxu0 %v83
    %134 = vmatprep.subr.mxu0 0.0
    %135 = vmatpush1.msra.mxu0 %v84
    %136 = vmatprep.subr.mxu0 0.0
    %137 = vmatpush1.msra.mxu0 %v85
    %138 = vmatprep.subr.mxu0 0.0
    %139 = vmatpush1.msra.mxu0 %v86
    %140 = vmatprep.subr.mxu0 0.0
    %141 = vmatpush1.msra.mxu0 %v87
    %142 = vmatprep.subr.mxu0 0.0
    %143 = vmatpush1.msra.mxu0 %v88
    %144 = vmatprep.subr.mxu0 0.0
    %145 = vmatpush1.msra.mxu0 %v89
    %146 = vmatprep.subr.mxu0 0.0
    %147 = vmatpush1.msra.mxu0 %v90
    %148 = vmatprep.subr.mxu0 0.0
    %149 = vmatpush1.msra.mxu0 %v91
    %150 = vmatprep.subr.mxu0 0.0
    %151 = vmatpush1.msra.mxu0 %v92
    %152 = vmatprep.subr.mxu0 0.0
    %153 = vmatpush1.msra.mxu0 %v93
    %154 = vmatprep.subr.mxu0 0.0
    %155 = vmatpush1.msra.mxu0 %v94
    %156 = vmatprep.subr.mxu0 0.0
    %157 = vmatpush1.msra.mxu0 %v95
    %158 = vmatprep.subr.mxu0 0.0
    %159 = vmatpush1.msra.mxu0 %v96
    %160 = vmatprep.subr.mxu0 0.0
    %161 = vmatpush1.msra.mxu0 %v97
    %162 = vmatprep.mubr.f32.mxu0 %v63
    %163 = vmatmul.mubr.f32.gmra.mrb[0].mxu0 %v62
    %v164 = vpop.f32.mrb[0].mxu0
    %v165 = vadd.f32 0.0, %v164
    %v166 = vpop.f32.mrb[0].mxu0
    %167 = vmatprep.mubr.f32.mxu0 %v65
    %168 = vmatmul.mubr.f32.gmra.mrb[0].mxu0 %v64
    %v169 = vpop.f32.mrb[0].mxu0
    %v170 = vadd.f32 0.0, %v169
    %v171 = vpop.f32.mrb[0].mxu0
    %172 = vdwg.mxu0
    %v173 = vld [vmem:[%s3] sm:$0xf]
    %v174 = vld [vmem:[%s3 + $0x4] sm:$0xf]
    %v175 = vld [vmem:[%s3 + $0x8] sm:$0xf]
    %v176 = vld [vmem:[%s3 + $0xc] sm:$0xf]
    %v177 = vld [vmem:[%s7] sm:$0xf]
    %v178 = vld [vmem:[%s7 + $0x4] sm:$0xf]
    %v179 = vld [vmem:[%s7 + $0x8] sm:$0xf]
    %v180 = vld [vmem:[%s7 + $0xc] sm:$0xf]
    %v181 = vld [vmem:[%s5] sm:$0x1]
    %v182 = vld [vmem:[%s9] sm:$0x1]
    %v183 = vpack.c.bf16 %v165, %v165
    %v184 = vld [vmem:[%s2] sm:$0xf]
    %v185 = vld [vmem:[%s2 + $0x4] sm:$0xf]
    %v186 = vld [vmem:[%s2 + $0x8] sm:$0xf]
    %v187 = vld [vmem:[%s2 + $0xc] sm:$0xf]
    %v188 = vld [vmem:[%s4] sm:$0x1]
    %v190 = vlaneseq
    %v191 = vshrl.u32 %v190, 7
    %v192 = vsub.s32 0, %v191
    %v193 = vrot.slane %v188, %v192
    %v199 = vunpack.c.l.b16 %v184
    %v200 = vunpack.c.l.b16 %v185
    %v201 = vunpack.c.l.b16 %v186
    %v202 = vunpack.c.l.b16 %v187
    %v203 = vpack.c.b16 %v200, %v199
    %v204 = vpack.c.b16 %v202, %v201
    %vm207 = vcmask 261120
    %v209 = vsel %vm207, %v183, 0
    %211 = vmatprep.subr.bf16.mxu0 0
    %212 = vmatpush1.bf16.msra.mxu0 %v203
    %213 = vmatprep.subr.bf16.mxu0 0
    %214 = vmatpush1.bf16.msra.mxu0 %v204
    %215 = vmatprep.subr.bf16.mxu0 0
    %216 = vmatpush1.bf16.msra.mxu0 0
    %217 = vmatprep.subr.bf16.mxu0 0
    %218 = vmatpush1.bf16.msra.mxu0 0
    %219 = vmatprep.subr.bf16.mxu0 0
    %220 = vmatpush1.bf16.msra.mxu0 0
    %221 = vmatprep.subr.bf16.mxu0 0
    %222 = vmatpush1.bf16.msra.mxu0 0
    %223 = vmatprep.subr.bf16.mxu0 0
    %224 = vmatpush1.bf16.msra.mxu0 0
    %225 = vmatprep.subr.bf16.mxu0 0
    %226 = vmatpush1.bf16.msra.mxu0 0
    %227 = vmatprep.subr.bf16.mxu0 0
    %228 = vmatpush1.bf16.msra.mxu0 0
    %229 = vmatprep.subr.bf16.mxu0 0
    %230 = vmatpush1.bf16.msra.mxu0 0
    %231 = vmatprep.subr.bf16.mxu0 0
    %232 = vmatpush1.bf16.msra.mxu0 0
    %233 = vmatprep.subr.bf16.mxu0 0
    %234 = vmatpush1.bf16.msra.mxu0 0
    %235 = vmatprep.subr.bf16.mxu0 0
    %236 = vmatpush1.bf16.msra.mxu0 0
    %237 = vmatprep.subr.bf16.mxu0 0
    %238 = vmatpush1.bf16.msra.mxu0 0
    %239 = vmatprep.subr.bf16.mxu0 0
    %240 = vmatpush1.bf16.msra.mxu0 0
    %241 = vmatprep.subr.bf16.mxu0 0
    %242 = vmatpush1.bf16.msra.mxu0 0
    %243 = vmatprep.mubr.bf16.mxu0 0
    %244 = vmatmul.mubr.bf16.gmra.mrb[0].mxu0 %v209
    %v245 = vpop.f32.mrb[0].mxu0
    %v246 = vadd.f32 %v193, %v245
    %v247 = vpop.f32.mrb[0].mxu0
    %v248 = vpop.f32.mrb[0].mxu0
    %v249 = vpop.f32.mrb[0].mxu0
    %250 = vdwg.mxu0
    %v255 = vunpack.c.l.b16 %v173
    %v256 = vunpack.c.l.b16 %v174
    %v257 = vunpack.c.l.b16 %v175
    %v258 = vunpack.c.l.b16 %v176
    %v259 = vpack.c.b16 %v256, %v255
    %v260 = vpack.c.b16 %v258, %v257
    %v264 = vsel %vm207, 0, 0
    %266 = vmatprep.subr.bf16.mxu0 0
    %267 = vmatpush1.bf16.msra.mxu0 %v259
    %268 = vmatprep.subr.bf16.mxu0 0
    %269 = vmatpush1.bf16.msra.mxu0 %v260
    %270 = vmatprep.subr.bf16.mxu0 0
    %271 = vmatpush1.bf16.msra.mxu0 0
    %272 = vmatprep.subr.bf16.mxu0 0
    %273 = vmatpush1.bf16.msra.mxu0 0
    %274 = vmatprep.subr.bf16.mxu0 0
    %275 = vmatpush1.bf16.msra.mxu0 0
    %276 = vmatprep.subr.bf16.mxu0 0
    %277 = vmatpush1.bf16.msra.mxu0 0
    %278 = vmatprep.subr.bf16.mxu0 0
    %279 = vmatpush1.bf16.msra.mxu0 0
    %280 = vmatprep.subr.bf16.mxu0 0
    %281 = vmatpush1.bf16.msra.mxu0 0
    %282 = vmatprep.subr.bf16.mxu0 0
    %283 = vmatpush1.bf16.msra.mxu0 0
    %284 = vmatprep.subr.bf16.mxu0 0
    %285 = vmatpush1.bf16.msra.mxu0 0
    %286 = vmatprep.subr.bf16.mxu0 0
    %287 = vmatpush1.bf16.msra.mxu0 0
    %288 = vmatprep.subr.bf16.mxu0 0
    %289 = vmatpush1.bf16.msra.mxu0 0
    %290 = vmatprep.subr.bf16.mxu0 0
    %291 = vmatpush1.bf16.msra.mxu0 0
    %292 = vmatprep.subr.bf16.mxu0 0
    %293 = vmatpush1.bf16.msra.mxu0 0
    %294 = vmatprep.subr.bf16.mxu0 0
    %295 = vmatpush1.bf16.msra.mxu0 0
    %296 = vmatprep.subr.bf16.mxu0 0
    %297 = vmatpush1.bf16.msra.mxu0 0
    %298 = vmatprep.mubr.bf16.mxu0 0
    %299 = vmatmul.mubr.bf16.gmra.mrb[0].mxu0 %v264
    %v300 = vpop.f32.mrb[0].mxu0
    %v301 = vadd.f32 0.0, %v300
    %v302 = vpop.f32.mrb[0].mxu0
    %v303 = vpop.f32.mrb[0].mxu0
    %v304 = vpop.f32.mrb[0].mxu0
    %305 = vdwg.mxu0
    %v306 = vadd.f32 %v246, %v301
    %v307 = vxor.u32 %v306, 2147483648
    %v308 = vmul.f32 %v307, 1.442695
    %v309 = vpow.pop %v308
    %v310 = vadd.f32 %v309, 1.0
    %v311 = vrcp.pop %v310
    %v312 = vmul.f32 1.0, %v311
    %v314 = vlaneseq
    %v315 = vshrl.u32 %v314, 7
    %v316 = vsub.s32 0, %v315
    %v317 = vrot.slane %v181, %v316
    %318 = vrot.lane.b32.xlu0 %v317, 64
    %v319 = vpop.permute.xlu0 %318
    %v321 = vadd.f32 %v301, %v319
    %323 = vrot.lane.b32.xlu0 %v321, 64
    %v324 = vpop.permute.xlu0 %323
    %v326 = vmul.f32 %v312, %v324
    %328 = vrot.lane.b32.xlu0 %v326, 64
    %v329 = vpop.permute.xlu0 %328
    %v331 = vadd.f32 %v246, %v329
    %v332 = vtanh.pop %v331
    %v333 = vsub.f32 1.0, %v312
    %335 = vrot.lane.b32.xlu0 %v332, 96
    %v336 = vpop.permute.xlu0 %335
    %v338 = vmul.f32 %v333, %v336
    %v339 = vmul.f32 %v312, 0.0
    %v340 = vadd.f32 %v338, %v339
    %v341 = vpack.c.bf16 %v340, %v340
    %343 = vrot.lane.b32.xlu0 %v341, 96
    %v344 = vpop.permute.xlu0 %343
    %v346 = vsel %vm207, %v344, 0
    %348 = vmatprep.subr.bf16.mxu0 0
    %349 = vmatpush1.bf16.msra.mxu0 %v259
    %350 = vmatprep.subr.bf16.mxu0 0
    %351 = vmatpush1.bf16.msra.mxu0 %v260
    %352 = vmatprep.subr.bf16.mxu0 0
    %353 = vmatpush1.bf16.msra.mxu0 0
    %354 = vmatprep.subr.bf16.mxu0 0
    %355 = vmatpush1.bf16.msra.mxu0 0
    %356 = vmatprep.subr.bf16.mxu0 0
    %357 = vmatpush1.bf16.msra.mxu0 0
    %358 = vmatprep.subr.bf16.mxu0 0
    %359 = vmatpush1.bf16.msra.mxu0 0
    %360 = vmatprep.subr.bf16.mxu0 0
    %361 = vmatpush1.bf16.msra.mxu0 0
    %362 = vmatprep.subr.bf16.mxu0 0
    %363 = vmatpush1.bf16.msra.mxu0 0
    %364 = vmatprep.subr.bf16.mxu0 0
    %365 = vmatpush1.bf16.msra.mxu0 0
    %366 = vmatprep.subr.bf16.mxu0 0
    %367 = vmatpush1.bf16.msra.mxu0 0
    %368 = vmatprep.subr.bf16.mxu0 0
    %369 = vmatpush1.bf16.msra.mxu0 0
    %370 = vmatprep.subr.bf16.mxu0 0
    %371 = vmatpush1.bf16.msra.mxu0 0
    %372 = vmatprep.subr.bf16.mxu0 0
    %373 = vmatpush1.bf16.msra.mxu0 0
    %374 = vmatprep.subr.bf16.mxu0 0
    %375 = vmatpush1.bf16.msra.mxu0 0
    %376 = vmatprep.subr.bf16.mxu0 0
    %377 = vmatpush1.bf16.msra.mxu0 0
    %378 = vmatprep.subr.bf16.mxu0 0
    %379 = vmatpush1.bf16.msra.mxu0 0
    %380 = vmatprep.mubr.bf16.mxu0 0
    %381 = vmatmul.mubr.bf16.gmra.mrb[0].mxu0 %v346
    %v382 = vpop.f32.mrb[0].mxu0
    %v383 = vadd.f32 0.0, %v382
    %v384 = vpop.f32.mrb[0].mxu0
    %v385 = vpop.f32.mrb[0].mxu0
    %v386 = vpop.f32.mrb[0].mxu0
    %387 = vdwg.mxu0
    %v389 = vrot.slane %v383, 7
    %v391 = vadd.f32 %v246, %v389
    %v392 = vxor.u32 %v391, 2147483648
    %v393 = vmul.f32 %v392, 1.442695
    %v394 = vpow.pop %v393
    %v395 = vadd.f32 %v394, 1.0
    %v396 = vrcp.pop %v395
    %v397 = vmul.f32 1.0, %v396
    %v398 = vadd.f32 %v383, %v319
    %v400 = vrot.slane %v398, 7
    %401 = vrot.lane.b32.xlu0 %v400, 64
    %v402 = vpop.permute.xlu0 %401
    %v404 = vmul.f32 %v397, %v402
    %406 = vrot.lane.b32.xlu0 %v404, 64
    %v407 = vpop.permute.xlu0 %406
    %v409 = vadd.f32 %v246, %v407
    %v410 = vtanh.pop %v409
    %v411 = vsub.f32 1.0, %v397
    %413 = vrot.lane.b32.xlu0 %v410, 96
    %v414 = vpop.permute.xlu0 %413
    %v416 = vmul.f32 %v411, %v414
    %v418 = vrot.slane %v340, 7
    %v420 = vmul.f32 %v397, %v418
    %v421 = vadd.f32 %v416, %v420
    %v422 = vpack.c.bf16 %v421, %v421
    %v424 = vshrl.u32 %v422, 16
    %426 = vrot.lane.b32.xlu0 %v424, 96
    %v427 = vpop.permute.xlu0 %426
    %v429 = vsel %vm207, %v427, 0
    %431 = vmatprep.subr.bf16.mxu0 0
    %432 = vmatpush1.bf16.msra.mxu0 %v259
    %433 = vmatprep.subr.bf16.mxu0 0
    %434 = vmatpush1.bf16.msra.mxu0 %v260
    %435 = vmatprep.subr.bf16.mxu0 0
    %436 = vmatpush1.bf16.msra.mxu0 0
    %437 = vmatprep.subr.bf16.mxu0 0
    %438 = vmatpush1.bf16.msra.mxu0 0
    %439 = vmatprep.subr.bf16.mxu0 0
    %440 = vmatpush1.bf16.msra.mxu0 0
    %441 = vmatprep.subr.bf16.mxu0 0
    %442 = vmatpush1.bf16.msra.mxu0 0
    %443 = vmatprep.subr.bf16.mxu0 0
    %444 = vmatpush1.bf16.msra.mxu0 0
    %445 = vmatprep.subr.bf16.mxu0 0
    %446 = vmatpush1.bf16.msra.mxu0 0
    %447 = vmatprep.subr.bf16.mxu0 0
    %448 = vmatpush1.bf16.msra.mxu0 0
    %449 = vmatprep.subr.bf16.mxu0 0
    %450 = vmatpush1.bf16.msra.mxu0 0
    %451 = vmatprep.subr.bf16.mxu0 0
    %452 = vmatpush1.bf16.msra.mxu0 0
    %453 = vmatprep.subr.bf16.mxu0 0
    %454 = vmatpush1.bf16.msra.mxu0 0
    %455 = vmatprep.subr.bf16.mxu0 0
    %456 = vmatpush1.bf16.msra.mxu0 0
    %457 = vmatprep.subr.bf16.mxu0 0
    %458 = vmatpush1.bf16.msra.mxu0 0
    %459 = vmatprep.subr.bf16.mxu0 0
    %460 = vmatpush1.bf16.msra.mxu0 0
    %461 = vmatprep.subr.bf16.mxu0 0
    %462 = vmatpush1.bf16.msra.mxu0 0
    %463 = vmatprep.mubr.bf16.mxu0 0
    %464 = vmatmul.mubr.bf16.gmra.mrb[0].mxu0 %v429
    %v465 = vpop.f32.mrb[0].mxu0
    %v466 = vadd.f32 0.0, %v465
    %v467 = vpop.f32.mrb[0].mxu0
    %v468 = vpop.f32.mrb[0].mxu0
    %v469 = vpop.f32.mrb[0].mxu0
    %470 = vdwg.mxu0
    %v472 = vrot.slane %v466, 6
    %v474 = vadd.f32 %v246, %v472
    %v475 = vxor.u32 %v474, 2147483648
    %v476 = vmul.f32 %v475, 1.442695
    %v477 = vpow.pop %v476
    %v478 = vadd.f32 %v477, 1.0
    %v479 = vrcp.pop %v478
    %v480 = vmul.f32 1.0, %v479
    %v481 = vadd.f32 %v466, %v319
    %v483 = vrot.slane %v481, 6
    %484 = vrot.lane.b32.xlu0 %v483, 64
    %v485 = vpop.permute.xlu0 %484
    %v487 = vmul.f32 %v480, %v485
    %489 = vrot.lane.b32.xlu0 %v487, 64
    %v490 = vpop.permute.xlu0 %489
    %v492 = vadd.f32 %v246, %v490
    %v493 = vtanh.pop %v492
    %v494 = vsub.f32 1.0, %v480
    %496 = vrot.lane.b32.xlu0 %v493, 96
    %v497 = vpop.permute.xlu0 %496
    %v499 = vmul.f32 %v494, %v497
    %v501 = vrot.slane %v421, 7
    %v503 = vmul.f32 %v480, %v501
    %v504 = vadd.f32 %v499, %v503
    %v505 = vpack.c.bf16 %v504, %v504
    %v507 = vrot.slane %v505, 1
    %508 = vrot.lane.b32.xlu0 %v507, 96
    %v509 = vpop.permute.xlu0 %508
    %v511 = vsel %vm207, %v509, 0
    %513 = vmatprep.subr.bf16.mxu0 0
    %514 = vmatpush1.bf16.msra.mxu0 %v259
    %515 = vmatprep.subr.bf16.mxu0 0
    %516 = vmatpush1.bf16.msra.mxu0 %v260
    %517 = vmatprep.subr.bf16.mxu0 0
    %518 = vmatpush1.bf16.msra.mxu0 0
    %519 = vmatprep.subr.bf16.mxu0 0
    %520 = vmatpush1.bf16.msra.mxu0 0
    %521 = vmatprep.subr.bf16.mxu0 0
    %522 = vmatpush1.bf16.msra.mxu0 0
    %523 = vmatprep.subr.bf16.mxu0 0
    %524 = vmatpush1.bf16.msra.mxu0 0
    %525 = vmatprep.subr.bf16.mxu0 0
    %526 = vmatpush1.bf16.msra.mxu0 0
    %527 = vmatprep.subr.bf16.mxu0 0
    %528 = vmatpush1.bf16.msra.mxu0 0
    %529 = vmatprep.subr.bf16.mxu0 0
    %530 = vmatpush1.bf16.msra.mxu0 0
    %531 = vmatprep.subr.bf16.mxu0 0
    %532 = vmatpush1.bf16.msra.mxu0 0
    %533 = vmatprep.subr.bf16.mxu0 0
    %534 = vmatpush1.bf16.msra.mxu0 0
    %535 = vmatprep.subr.bf16.mxu0 0
    %536 = vmatpush1.bf16.msra.mxu0 0
    %537 = vmatprep.subr.bf16.mxu0 0
    %538 = vmatpush1.bf16.msra.mxu0 0
    %539 = vmatprep.subr.bf16.mxu0 0
    %540 = vmatpush1.bf16.msra.mxu0 0
    %541 = vmatprep.subr.bf16.mxu0 0
    %542 = vmatpush1.bf16.msra.mxu0 0
    %543 = vmatprep.subr.bf16.mxu0 0
    %544 = vmatpush1.bf16.msra.mxu0 0
    %545 = vmatprep.mubr.bf16.mxu0 0
    %546 = vmatmul.mubr.bf16.gmra.mrb[0].mxu0 %v511
    %v547 = vpop.f32.mrb[0].mxu0
    %v548 = vadd.f32 0.0, %v547
    %v549 = vpop.f32.mrb[0].mxu0
    %v550 = vpop.f32.mrb[0].mxu0
    %v551 = vpop.f32.mrb[0].mxu0
    %552 = vdwg.mxu0
    %v554 = vrot.slane %v548, 5
    %v556 = vadd.f32 %v246, %v554
    %v557 = vxor.u32 %v556, 2147483648
    %v558 = vmul.f32 %v557, 1.442695
    %v559 = vpow.pop %v558
    %v560 = vadd.f32 %v559, 1.0
    %v561 = vrcp.pop %v560
    %v562 = vmul.f32 1.0, %v561
    %v563 = vadd.f32 %v548, %v319
    %v565 = vrot.slane %v563, 5
    %566 = vrot.lane.b32.xlu0 %v565, 64
    %v567 = vpop.permute.xlu0 %566
    %v569 = vmul.f32 %v562, %v567
    %571 = vrot.lane.b32.xlu0 %v569, 64
    %v572 = vpop.permute.xlu0 %571
    %v574 = vadd.f32 %v246, %v572
    %v575 = vtanh.pop %v574
    %v576 = vsub.f32 1.0, %v562
    %578 = vrot.lane.b32.xlu0 %v575, 96
    %v579 = vpop.permute.xlu0 %578
    %v581 = vmul.f32 %v576, %v579
    %v583 = vrot.slane %v504, 7
    %v585 = vmul.f32 %v562, %v583
    %v586 = vadd.f32 %v581, %v585
    %v587 = vpack.c.bf16 %v586, %v586
    %v589 = vshrl.u32 %v587, 16
    %v591 = vrot.slane %v589, 1
    %592 = vrot.lane.b32.xlu0 %v591, 96
    %v593 = vpop.permute.xlu0 %592
    %v595 = vsel %vm207, %v593, 0
    %597 = vmatprep.subr.bf16.mxu0 0
    %598 = vmatpush1.bf16.msra.mxu0 %v259
    %599 = vmatprep.subr.bf16.mxu0 0
    %600 = vmatpush1.bf16.msra.mxu0 %v260
    %601 = vmatprep.subr.bf16.mxu0 0
    %602 = vmatpush1.bf16.msra.mxu0 0
    %603 = vmatprep.subr.bf16.mxu0 0
    %604 = vmatpush1.bf16.msra.mxu0 0
    %605 = vmatprep.subr.bf16.mxu0 0
    %606 = vmatpush1.bf16.msra.mxu0 0
    %607 = vmatprep.subr.bf16.mxu0 0
    %608 = vmatpush1.bf16.msra.mxu0 0
    %609 = vmatprep.subr.bf16.mxu0 0
    %610 = vmatpush1.bf16.msra.mxu0 0
    %611 = vmatprep.subr.bf16.mxu0 0
    %612 = vmatpush1.bf16.msra.mxu0 0
    %613 = vmatprep.subr.bf16.mxu0 0
    %614 = vmatpush1.bf16.msra.mxu0 0
    %615 = vmatprep.subr.bf16.mxu0 0
    %616 = vmatpush1.bf16.msra.mxu0 0
    %617 = vmatprep.subr.bf16.mxu0 0
    %618 = vmatpush1.bf16.msra.mxu0 0
    %619 = vmatprep.subr.bf16.mxu0 0
    %620 = vmatpush1.bf16.msra.mxu0 0
    %621 = vmatprep.subr.bf16.mxu0 0
    %622 = vmatpush1.bf16.msra.mxu0 0
    %623 = vmatprep.subr.bf16.mxu0 0
    %624 = vmatpush1.bf16.msra.mxu0 0
    %625 = vmatprep.subr.bf16.mxu0 0
    %626 = vmatpush1.bf16.msra.mxu0 0
    %627 = vmatprep.subr.bf16.mxu0 0
    %628 = vmatpush1.bf16.msra.mxu0 0
    %629 = vmatprep.mubr.bf16.mxu0 0
    %630 = vmatmul.mubr.bf16.gmra.mrb[0].mxu0 %v595
    %v631 = vpop.f32.mrb[0].mxu0
    %v632 = vadd.f32 0.0, %v631
    %v633 = vpop.f32.mrb[0].mxu0
    %v634 = vpop.f32.mrb[0].mxu0
    %v635 = vpop.f32.mrb[0].mxu0
    %636 = vdwg.mxu0
    %v638 = vrot.slane %v632, 4
    %v640 = vadd.f32 %v246, %v638
    %v641 = vxor.u32 %v640, 2147483648
    %v642 = vmul.f32 %v641, 1.442695
    %v643 = vpow.pop %v642
    %v644 = vadd.f32 %v643, 1.0
    %v645 = vrcp.pop %v644
    %v646 = vmul.f32 1.0, %v645
    %v647 = vadd.f32 %v632, %v319
    %v649 = vrot.slane %v647, 4
    %650 = vrot.lane.b32.xlu0 %v649, 64
    %v651 = vpop.permute.xlu0 %650
    %v653 = vmul.f32 %v646, %v651
    %655 = vrot.lane.b32.xlu0 %v653, 64
    %v656 = vpop.permute.xlu0 %655
    %v658 = vadd.f32 %v246, %v656
    %v659 = vtanh.pop %v658
    %v660 = vsub.f32 1.0, %v646
    %662 = vrot.lane.b32.xlu0 %v659, 96
    %v663 = vpop.permute.xlu0 %662
    %v665 = vmul.f32 %v660, %v663
    %v667 = vrot.slane %v586, 7
    %v669 = vmul.f32 %v646, %v667
    %v670 = vadd.f32 %v665, %v669
    %v671 = vpack.c.bf16 %v670, %v670
    %v673 = vrot.slane %v671, 2
    %674 = vrot.lane.b32.xlu0 %v673, 96
    %v675 = vpop.permute.xlu0 %674
    %v677 = vsel %vm207, %v675, 0
    %679 = vmatprep.subr.bf16.mxu0 0
    %680 = vmatpush1.bf16.msra.mxu0 %v259
    %681 = vmatprep.subr.bf16.mxu0 0
    %682 = vmatpush1.bf16.msra.mxu0 %v260
    %683 = vmatprep.subr.bf16.mxu0 0
    %684 = vmatpush1.bf16.msra.mxu0 0
    %685 = vmatprep.subr.bf16.mxu0 0
    %686 = vmatpush1.bf16.msra.mxu0 0
    %687 = vmatprep.subr.bf16.mxu0 0
    %688 = vmatpush1.bf16.msra.mxu0 0
    %689 = vmatprep.subr.bf16.mxu0 0
    %690 = vmatpush1.bf16.msra.mxu0 0
    %691 = vmatprep.subr.bf16.mxu0 0
    %692 = vmatpush1.bf16.msra.mxu0 0
    %693 = vmatprep.subr.bf16.mxu0 0
    %694 = vmatpush1.bf16.msra.mxu0 0
    %695 = vmatprep.subr.bf16.mxu0 0
    %696 = vmatpush1.bf16.msra.mxu0 0
    %697 = vmatprep.subr.bf16.mxu0 0
    %698 = vmatpush1.bf16.msra.mxu0 0
    %699 = vmatprep.subr.bf16.mxu0 0
    %700 = vmatpush1.bf16.msra.mxu0 0
    %701 = vmatprep.subr.bf16.mxu0 0
    %702 = vmatpush1.bf16.msra.mxu0 0
    %703 = vmatprep.subr.bf16.mxu0 0
    %704 = vmatpush1.bf16.msra.mxu0 0
    %705 = vmatprep.subr.bf16.mxu0 0
    %706 = vmatpush1.bf16.msra.mxu0 0
    %707 = vmatprep.subr.bf16.mxu0 0
    %708 = vmatpush1.bf16.msra.mxu0 0
    %709 = vmatprep.subr.bf16.mxu0 0
    %710 = vmatpush1.bf16.msra.mxu0 0
    %711 = vmatprep.mubr.bf16.mxu0 0
    %712 = vmatmul.mubr.bf16.gmra.mrb[0].mxu0 %v677
    %v713 = vpop.f32.mrb[0].mxu0
    %v714 = vadd.f32 0.0, %v713
    %v715 = vpop.f32.mrb[0].mxu0
    %v716 = vpop.f32.mrb[0].mxu0
    %v717 = vpop.f32.mrb[0].mxu0
    %718 = vdwg.mxu0
    %v720 = vrot.slane %v714, 3
    %v722 = vadd.f32 %v246, %v720
    %v723 = vxor.u32 %v722, 2147483648
    %v724 = vmul.f32 %v723, 1.442695
    %v725 = vpow.pop %v724
    %v726 = vadd.f32 %v725, 1.0
    %v727 = vrcp.pop %v726
    %v728 = vmul.f32 1.0, %v727
    %v729 = vadd.f32 %v714, %v319
    %v731 = vrot.slane %v729, 3
    %732 = vrot.lane.b32.xlu0 %v731, 64
    %v733 = vpop.permute.xlu0 %732
    %v735 = vmul.f32 %v728, %v733
    %737 = vrot.lane.b32.xlu0 %v735, 64
    %v738 = vpop.permute.xlu0 %737
    %v740 = vadd.f32 %v246, %v738
    %v741 = vtanh.pop %v740
    %v742 = vsub.f32 1.0, %v728
    %744 = vrot.lane.b32.xlu0 %v741, 96
    %v745 = vpop.permute.xlu0 %744
    %v747 = vmul.f32 %v742, %v745
    %v749 = vrot.slane %v670, 7
    %v751 = vmul.f32 %v728, %v749
    %v752 = vadd.f32 %v747, %v751
    %v753 = vpack.c.bf16 %v752, %v752
    %v755 = vshrl.u32 %v753, 16
    %v757 = vrot.slane %v755, 2
    %758 = vrot.lane.b32.xlu0 %v757, 96
    %v759 = vpop.permute.xlu0 %758
    %v761 = vsel %vm207, %v759, 0
    %763 = vmatprep.subr.bf16.mxu0 0
    %764 = vmatpush1.bf16.msra.mxu0 %v259
    %765 = vmatprep.subr.bf16.mxu0 0
    %766 = vmatpush1.bf16.msra.mxu0 %v260
    %767 = vmatprep.subr.bf16.mxu0 0
    %768 = vmatpush1.bf16.msra.mxu0 0
    %769 = vmatprep.subr.bf16.mxu0 0
    %770 = vmatpush1.bf16.msra.mxu0 0
    %771 = vmatprep.subr.bf16.mxu0 0
    %772 = vmatpush1.bf16.msra.mxu0 0
    %773 = vmatprep.subr.bf16.mxu0 0
    %774 = vmatpush1.bf16.msra.mxu0 0
    %775 = vmatprep.subr.bf16.mxu0 0
    %776 = vmatpush1.bf16.msra.mxu0 0
    %777 = vmatprep.subr.bf16.mxu0 0
    %778 = vmatpush1.bf16.msra.mxu0 0
    %779 = vmatprep.subr.bf16.mxu0 0
    %780 = vmatpush1.bf16.msra.mxu0 0
    %781 = vmatprep.subr.bf16.mxu0 0
    %782 = vmatpush1.bf16.msra.mxu0 0
    %783 = vmatprep.subr.bf16.mxu0 0
    %784 = vmatpush1.bf16.msra.mxu0 0
    %785 = vmatprep.subr.bf16.mxu0 0
    %786 = vmatpush1.bf16.msra.mxu0 0
    %787 = vmatprep.subr.bf16.mxu0 0
    %788 = vmatpush1.bf16.msra.mxu0 0
    %789 = vmatprep.subr.bf16.mxu0 0
    %790 = vmatpush1.bf16.msra.mxu0 0
    %791 = vmatprep.subr.bf16.mxu0 0
    %792 = vmatpush1.bf16.msra.mxu0 0
    %793 = vmatprep.subr.bf16.mxu0 0
    %794 = vmatpush1.bf16.msra.mxu0 0
    %795 = vmatprep.mubr.bf16.mxu0 0
    %796 = vmatmul.mubr.bf16.gmra.mrb[0].mxu0 %v761
    %v797 = vpop.f32.mrb[0].mxu0
    %v798 = vadd.f32 0.0, %v797
    %v799 = vpop.f32.mrb[0].mxu0
    %v800 = vpop.f32.mrb[0].mxu0
    %v801 = vpop.f32.mrb[0].mxu0
    %802 = vdwg.mxu0
    %v804 = vrot.slane %v798, 2
    %v806 = vadd.f32 %v246, %v804
    %v807 = vxor.u32 %v806, 2147483648
    %v808 = vmul.f32 %v807, 1.442695
    %v809 = vpow.pop %v808
    %v810 = vadd.f32 %v809, 1.0
    %v811 = vrcp.pop %v810
    %v812 = vmul.f32 1.0, %v811
    %v813 = vadd.f32 %v798, %v319
    %v815 = vrot.slane %v813, 2
    %816 = vrot.lane.b32.xlu0 %v815, 64
    %v817 = vpop.permute.xlu0 %816
    %v819 = vmul.f32 %v812, %v817
    %821 = vrot.lane.b32.xlu0 %v819, 64
    %v822 = vpop.permute.xlu0 %821
    %v824 = vadd.f32 %v246, %v822
    %v825 = vtanh.pop %v824
    %v826 = vsub.f32 1.0, %v812
    %828 = vrot.lane.b32.xlu0 %v825, 96
    %v829 = vpop.permute.xlu0 %828
    %v831 = vmul.f32 %v826, %v829
    %v833 = vrot.slane %v752, 7
    %v835 = vmul.f32 %v812, %v833
    %v836 = vadd.f32 %v831, %v835
    %v837 = vpack.c.bf16 %v836, %v836
    %v839 = vrot.slane %v837, 3
    %840 = vrot.lane.b32.xlu0 %v839, 96
    %v841 = vpop.permute.xlu0 %840
    %v843 = vsel %vm207, %v841, 0
    %845 = vmatprep.subr.bf16.mxu0 0
    %846 = vmatpush1.bf16.msra.mxu0 %v259
    %847 = vmatprep.subr.bf16.mxu0 0
    %848 = vmatpush1.bf16.msra.mxu0 %v260
    %849 = vmatprep.subr.bf16.mxu0 0
    %850 = vmatpush1.bf16.msra.mxu0 0
    %851 = vmatprep.subr.bf16.mxu0 0
    %852 = vmatpush1.bf16.msra.mxu0 0
    %853 = vmatprep.subr.bf16.mxu0 0
    %854 = vmatpush1.bf16.msra.mxu0 0
    %855 = vmatprep.subr.bf16.mxu0 0
    %856 = vmatpush1.bf16.msra.mxu0 0
    %857 = vmatprep.subr.bf16.mxu0 0
    %858 = vmatpush1.bf16.msra.mxu0 0
    %859 = vmatprep.subr.bf16.mxu0 0
    %860 = vmatpush1.bf16.msra.mxu0 0
    %861 = vmatprep.subr.bf16.mxu0 0
    %862 = vmatpush1.bf16.msra.mxu0 0
    %863 = vmatprep.subr.bf16.mxu0 0
    %864 = vmatpush1.bf16.msra.mxu0 0
    %865 = vmatprep.subr.bf16.mxu0 0
    %866 = vmatpush1.bf16.msra.mxu0 0
    %867 = vmatprep.subr.bf16.mxu0 0
    %868 = vmatpush1.bf16.msra.mxu0 0
    %869 = vmatprep.subr.bf16.mxu0 0
    %870 = vmatpush1.bf16.msra.mxu0 0
    %871 = vmatprep.subr.bf16.mxu0 0
    %872 = vmatpush1.bf16.msra.mxu0 0
    %873 = vmatprep.subr.bf16.mxu0 0
    %874 = vmatpush1.bf16.msra.mxu0 0
    %875 = vmatprep.subr.bf16.mxu0 0
    %876 = vmatpush1.bf16.msra.mxu0 0
    %877 = vmatprep.mubr.bf16.mxu0 0
    %878 = vmatmul.mubr.bf16.gmra.mrb[0].mxu0 %v843
    %v879 = vpop.f32.mrb[0].mxu0
    %v880 = vadd.f32 0.0, %v879
    %v881 = vpop.f32.mrb[0].mxu0
    %v882 = vpop.f32.mrb[0].mxu0
    %v883 = vpop.f32.mrb[0].mxu0
    %884 = vdwg.mxu0
    %v886 = vrot.slane %v880, 1
    %v888 = vadd.f32 %v246, %v886
    %v889 = vxor.u32 %v888, 2147483648
    %v890 = vmul.f32 %v889, 1.442695
    %v891 = vpow.pop %v890
    %v892 = vadd.f32 %v891, 1.0
    %v893 = vrcp.pop %v892
    %v894 = vmul.f32 1.0, %v893
    %v895 = vadd.f32 %v880, %v319
    %v897 = vrot.slane %v895, 1
    %898 = vrot.lane.b32.xlu0 %v897, 64
    %v899 = vpop.permute.xlu0 %898
    %v901 = vmul.f32 %v894, %v899
    %903 = vrot.lane.b32.xlu0 %v901, 64
    %v904 = vpop.permute.xlu0 %903
    %v906 = vadd.f32 %v246, %v904
    %v907 = vtanh.pop %v906
    %v908 = vsub.f32 1.0, %v894
    %910 = vrot.lane.b32.xlu0 %v907, 96
    %v911 = vpop.permute.xlu0 %910
    %v913 = vmul.f32 %v908, %v911
    %v915 = vrot.slane %v836, 7
    %v917 = vmul.f32 %v894, %v915
    %v918 = vadd.f32 %v913, %v917
    %v919 = vlaneseq
    %v920 = vshrl.u32 %v919, 7
    %v921 = vsub.s32 7, %v920
    %v922 = vrot.slane %v918, %v921
    %v923 = vsel %vm207, %v170, %v922
    %v924 = vpack.c.bf16 %v923, %v923
    %v925 = vld [vmem:[%s6] sm:$0xf]
    %v926 = vld [vmem:[%s6 + $0x4] sm:$0xf]
    %v927 = vld [vmem:[%s6 + $0x8] sm:$0xf]
    %v928 = vld [vmem:[%s6 + $0xc] sm:$0xf]
    %v929 = vld [vmem:[%s6 + $0x10] sm:$0xf]
    %v930 = vld [vmem:[%s6 + $0x14] sm:$0xf]
    %v931 = vld [vmem:[%s6 + $0x18] sm:$0xf]
    %v932 = vld [vmem:[%s6 + $0x1c] sm:$0xf]
    %v933 = vld [vmem:[%s8] sm:$0x1]
    %v935 = vlaneseq
    %v936 = vshrl.u32 %v935, 7
    %v937 = vsub.s32 0, %v936
    %v938 = vrot.slane %v933, %v937
    %v948 = vunpack.c.l.b16 %v925
    %v949 = vunpack.c.l.b16 %v926
    %v950 = vunpack.c.l.b16 %v927
    %v951 = vunpack.c.l.b16 %v928
    %v952 = vunpack.c.l.b16 %v929
    %v953 = vunpack.c.l.b16 %v930
    %v954 = vunpack.c.l.b16 %v931
    %v955 = vunpack.c.l.b16 %v932
    %v956 = vpack.c.b16 %v949, %v948
    %v957 = vpack.c.b16 %v951, %v950
    %v958 = vpack.c.b16 %v953, %v952
    %v959 = vpack.c.b16 %v955, %v954
    %vm964 = vcmask 523264
    %v966 = vsel %vm964, %v924, 0
    %968 = vmatprep.subr.bf16.mxu0 0
    %969 = vmatpush1.bf16.msra.mxu0 %v956
    %970 = vmatprep.subr.bf16.mxu0 0
    %971 = vmatpush1.bf16.msra.mxu0 %v957
    %972 = vmatprep.subr.bf16.mxu0 0
    %973 = vmatpush1.bf16.msra.mxu0 %v958
    %974 = vmatprep.subr.bf16.mxu0 0
    %975 = vmatpush1.bf16.msra.mxu0 %v959
    %976 = vmatprep.subr.bf16.mxu0 0
    %977 = vmatpush1.bf16.msra.mxu0 0
    %978 = vmatprep.subr.bf16.mxu0 0
    %979 = vmatpush1.bf16.msra.mxu0 0
    %980 = vmatprep.subr.bf16.mxu0 0
    %981 = vmatpush1.bf16.msra.mxu0 0
    %982 = vmatprep.subr.bf16.mxu0 0
    %983 = vmatpush1.bf16.msra.mxu0 0
    %984 = vmatprep.subr.bf16.mxu0 0
    %985 = vmatpush1.bf16.msra.mxu0 0
    %986 = vmatprep.subr.bf16.mxu0 0
    %987 = vmatpush1.bf16.msra.mxu0 0
    %988 = vmatprep.subr.bf16.mxu0 0
    %989 = vmatpush1.bf16.msra.mxu0 0
    %990 = vmatprep.subr.bf16.mxu0 0
    %991 = vmatpush1.bf16.msra.mxu0 0
    %992 = vmatprep.subr.bf16.mxu0 0
    %993 = vmatpush1.bf16.msra.mxu0 0
    %994 = vmatprep.subr.bf16.mxu0 0
    %995 = vmatpush1.bf16.msra.mxu0 0
    %996 = vmatprep.subr.bf16.mxu0 0
    %997 = vmatpush1.bf16.msra.mxu0 0
    %998 = vmatprep.subr.bf16.mxu0 0
    %999 = vmatpush1.bf16.msra.mxu0 0
    %1000 = vmatprep.mubr.bf16.mxu0 0
    %1001 = vmatmul.mubr.bf16.gmra.mrb[0].mxu0 %v966
    %v1002 = vpop.f32.mrb[0].mxu0
    %v1003 = vadd.f32 %v938, %v1002
    %v1004 = vpop.f32.mrb[0].mxu0
    %v1005 = vpop.f32.mrb[0].mxu0
    %v1006 = vpop.f32.mrb[0].mxu0
    %1007 = vdwg.mxu0
    %v1008 = vpack.c.bf16 %v918, %v918
    %v1010 = vshrl.u32 %v1008, 16
    %v1012 = vrot.slane %v1010, 3
    %1013 = vrot.lane.b32.xlu0 %v1012, 96
    %v1014 = vpop.permute.xlu0 %1013
    %v1019 = vunpack.c.l.b16 %v177
    %v1020 = vunpack.c.l.b16 %v178
    %v1021 = vunpack.c.l.b16 %v179
    %v1022 = vunpack.c.l.b16 %v180
    %v1023 = vpack.c.b16 %v1020, %v1019
    %v1024 = vpack.c.b16 %v1022, %v1021
    %v1028 = vsel %vm207, %v1014, 0
    %1030 = vmatprep.subr.bf16.mxu0 0
    %1031 = vmatpush1.bf16.msra.mxu0 %v1023
    %1032 = vmatprep.subr.bf16.mxu0 0
    %1033 = vmatpush1.bf16.msra.mxu0 %v1024
    %1034 = vmatprep.subr.bf16.mxu0 0
    %1035 = vmatpush1.bf16.msra.mxu0 0
    %1036 = vmatprep.subr.bf16.mxu0 0
    %1037 = vmatpush1.bf16.msra.mxu0 0
    %1038 = vmatprep.subr.bf16.mxu0 0
    %1039 = vmatpush1.bf16.msra.mxu0 0
    %1040 = vmatprep.subr.bf16.mxu0 0
    %1041 = vmatpush1.bf16.msra.mxu0 0
    %1042 = vmatprep.subr.bf16.mxu0 0
    %1043 = vmatpush1.bf16.msra.mxu0 0
    %1044 = vmatprep.subr.bf16.mxu0 0
    %1045 = vmatpush1.bf16.msra.mxu0 0
    %1046 = vmatprep.subr.bf16.mxu0 0
    %1047 = vmatpush1.bf16.msra.mxu0 0
    %1048 = vmatprep.subr.bf16.mxu0 0
    %1049 = vmatpush1.bf16.msra.mxu0 0
    %1050 = vmatprep.subr.bf16.mxu0 0
    %1051 = vmatpush1.bf16.msra.mxu0 0
    %1052 = vmatprep.subr.bf16.mxu0 0
    %1053 = vmatpush1.bf16.msra.mxu0 0
    %1054 = vmatprep.subr.bf16.mxu0 0
    %1055 = vmatpush1.bf16.msra.mxu0 0
    %1056 = vmatprep.subr.bf16.mxu0 0
    %1057 = vmatpush1.bf16.msra.mxu0 0
    %1058 = vmatprep.subr.bf16.mxu0 0
    %1059 = vmatpush1.bf16.msra.mxu0 0
    %1060 = vmatprep.subr.bf16.mxu0 0
    %1061 = vmatpush1.bf16.msra.mxu0 0
    %1062 = vmatprep.mubr.bf16.mxu0 0
    %1063 = vmatmul.mubr.bf16.gmra.mrb[0].mxu0 %v1028
    %v1064 = vpop.f32.mrb[0].mxu0
    %v1065 = vadd.f32 0.0, %v1064
    %v1066 = vpop.f32.mrb[0].mxu0
    %v1067 = vpop.f32.mrb[0].mxu0
    %v1068 = vpop.f32.mrb[0].mxu0
    %1069 = vdwg.mxu0
    %v1070 = vadd.f32 %v1003, %v1065
    %v1071 = vxor.u32 %v1070, 2147483648
    %v1072 = vmul.f32 %v1071, 1.442695
    %v1073 = vpow.pop %v1072
    %v1074 = vadd.f32 %v1073, 1.0
    %v1075 = vrcp.pop %v1074
    %v1076 = vmul.f32 1.0, %v1075
    %v1078 = vlaneseq
    %v1079 = vshrl.u32 %v1078, 7
    %v1080 = vsub.s32 0, %v1079
    %v1081 = vrot.slane %v182, %v1080
    %1082 = vrot.lane.b32.xlu0 %v1081, 64
    %v1083 = vpop.permute.xlu0 %1082
    %v1085 = vadd.f32 %v1065, %v1083
    %1087 = vrot.lane.b32.xlu0 %v1085, 64
    %v1088 = vpop.permute.xlu0 %1087
    %v1090 = vmul.f32 %v1076, %v1088
    %1092 = vrot.lane.b32.xlu0 %v1090, 64
    %v1093 = vpop.permute.xlu0 %1092
    %v1095 = vadd.f32 %v1003, %v1093
    %v1096 = vtanh.pop %v1095
    %v1097 = vsub.f32 1.0, %v1076
    %1099 = vrot.lane.b32.xlu0 %v1096, 96
    %v1100 = vpop.permute.xlu0 %1099
    %v1102 = vmul.f32 %v1097, %v1100
    %v1104 = vrot.slane %v918, 7
    %v1106 = vmul.f32 %v1076, %v1104
    %v1107 = vadd.f32 %v1102, %v1106
    %v1108 = vpack.c.bf16 %v1107, %v1107
    %1110 = vrot.lane.b32.xlu0 %v1108, 96
    %v1111 = vpop.permute.xlu0 %1110
    %v1113 = vsel %vm207, %v1111, 0
    %1115 = vmatprep.subr.bf16.mxu0 0
    %1116 = vmatpush1.bf16.msra.mxu0 %v1023
    %1117 = vmatprep.subr.bf16.mxu0 0
    %1118 = vmatpush1.bf16.msra.mxu0 %v1024
    %1119 = vmatprep.subr.bf16.mxu0 0
    %1120 = vmatpush1.bf16.msra.mxu0 0
    %1121 = vmatprep.subr.bf16.mxu0 0
    %1122 = vmatpush1.bf16.msra.mxu0 0
    %1123 = vmatprep.subr.bf16.mxu0 0
    %1124 = vmatpush1.bf16.msra.mxu0 0
    %1125 = vmatprep.subr.bf16.mxu0 0
    %1126 = vmatpush1.bf16.msra.mxu0 0
    %1127 = vmatprep.subr.bf16.mxu0 0
    %1128 = vmatpush1.bf16.msra.mxu0 0
    %1129 = vmatprep.subr.bf16.mxu0 0
    %1130 = vmatpush1.bf16.msra.mxu0 0
    %1131 = vmatprep.subr.bf16.mxu0 0
    %1132 = vmatpush1.bf16.msra.mxu0 0
    %1133 = vmatprep.subr.bf16.mxu0 0
    %1134 = vmatpush1.bf16.msra.mxu0 0
    %1135 = vmatprep.subr.bf16.mxu0 0
    %1136 = vmatpush1.bf16.msra.mxu0 0
    %1137 = vmatprep.subr.bf16.mxu0 0
    %1138 = vmatpush1.bf16.msra.mxu0 0
    %1139 = vmatprep.subr.bf16.mxu0 0
    %1140 = vmatpush1.bf16.msra.mxu0 0
    %1141 = vmatprep.subr.bf16.mxu0 0
    %1142 = vmatpush1.bf16.msra.mxu0 0
    %1143 = vmatprep.subr.bf16.mxu0 0
    %1144 = vmatpush1.bf16.msra.mxu0 0
    %1145 = vmatprep.subr.bf16.mxu0 0
    %1146 = vmatpush1.bf16.msra.mxu0 0
    %1147 = vmatprep.mubr.bf16.mxu0 0
    %1148 = vmatmul.mubr.bf16.gmra.mrb[0].mxu0 %v1113
    %v1149 = vpop.f32.mrb[0].mxu0
    %v1150 = vadd.f32 0.0, %v1149
    %v1151 = vpop.f32.mrb[0].mxu0
    %v1152 = vpop.f32.mrb[0].mxu0
    %v1153 = vpop.f32.mrb[0].mxu0
    %1154 = vdwg.mxu0
    %v1156 = vrot.slane %v1150, 7
    %v1158 = vadd.f32 %v1003, %v1156
    %v1159 = vxor.u32 %v1158, 2147483648
    %v1160 = vmul.f32 %v1159, 1.442695
    %v1161 = vpow.pop %v1160
    %v1162 = vadd.f32 %v1161, 1.0
    %v1163 = vrcp.pop %v1162
    %v1164 = vmul.f32 1.0, %v1163
    %v1165 = vadd.f32 %v1150, %v1083
    %v1167 = vrot.slane %v1165, 7
    %1168 = vrot.lane.b32.xlu0 %v1167, 64
    %v1169 = vpop.permute.xlu0 %1168
    %v1171 = vmul.f32 %v1164, %v1169
    %1173 = vrot.lane.b32.xlu0 %v1171, 64
    %v1174 = vpop.permute.xlu0 %1173
    %v1176 = vadd.f32 %v1003, %v1174
    %v1177 = vtanh.pop %v1176
    %v1178 = vsub.f32 1.0, %v1164
    %1180 = vrot.lane.b32.xlu0 %v1177, 96
    %v1181 = vpop.permute.xlu0 %1180
    %v1183 = vmul.f32 %v1178, %v1181
    %v1185 = vrot.slane %v1107, 7
    %v1187 = vmul.f32 %v1164, %v1185
    %v1188 = vadd.f32 %v1183, %v1187
    %v1189 = vpack.c.bf16 %v1188, %v1188
    %v1191 = vshrl.u32 %v1189, 16
    %1193 = vrot.lane.b32.xlu0 %v1191, 96
    %v1194 = vpop.permute.xlu0 %1193
    %v1196 = vsel %vm207, %v1194, 0
    %1198 = vmatprep.subr.bf16.mxu0 0
    %1199 = vmatpush1.bf16.msra.mxu0 %v1023
    %1200 = vmatprep.subr.bf16.mxu0 0
    %1201 = vmatpush1.bf16.msra.mxu0 %v1024
    %1202 = vmatprep.subr.bf16.mxu0 0
    %1203 = vmatpush1.bf16.msra.mxu0 0
    %1204 = vmatprep.subr.bf16.mxu0 0
    %1205 = vmatpush1.bf16.msra.mxu0 0
    %1206 = vmatprep.subr.bf16.mxu0 0
    %1207 = vmatpush1.bf16.msra.mxu0 0
    %1208 = vmatprep.subr.bf16.mxu0 0
    %1209 = vmatpush1.bf16.msra.mxu0 0
    %1210 = vmatprep.subr.bf16.mxu0 0
    %1211 = vmatpush1.bf16.msra.mxu0 0
    %1212 = vmatprep.subr.bf16.mxu0 0
    %1213 = vmatpush1.bf16.msra.mxu0 0
    %1214 = vmatprep.subr.bf16.mxu0 0
    %1215 = vmatpush1.bf16.msra.mxu0 0
    %1216 = vmatprep.subr.bf16.mxu0 0
    %1217 = vmatpush1.bf16.msra.mxu0 0
    %1218 = vmatprep.subr.bf16.mxu0 0
    %1219 = vmatpush1.bf16.msra.mxu0 0
    %1220 = vmatprep.subr.bf16.mxu0 0
    %1221 = vmatpush1.bf16.msra.mxu0 0
    %1222 = vmatprep.subr.bf16.mxu0 0
    %1223 = vmatpush1.bf16.msra.mxu0 0
    %1224 = vmatprep.subr.bf16.mxu0 0
    %1225 = vmatpush1.bf16.msra.mxu0 0
    %1226 = vmatprep.subr.bf16.mxu0 0
    %1227 = vmatpush1.bf16.msra.mxu0 0
    %1228 = vmatprep.subr.bf16.mxu0 0
    %1229 = vmatpush1.bf16.msra.mxu0 0
    %1230 = vmatprep.mubr.bf16.mxu0 0
    %1231 = vmatmul.mubr.bf16.gmra.mrb[0].mxu0 %v1196
    %v1232 = vpop.f32.mrb[0].mxu0
    %v1233 = vadd.f32 0.0, %v1232
    %v1234 = vpop.f32.mrb[0].mxu0
    %v1235 = vpop.f32.mrb[0].mxu0
    %v1236 = vpop.f32.mrb[0].mxu0
    %1237 = vdwg.mxu0
    %v1239 = vrot.slane %v1233, 6
    %v1241 = vadd.f32 %v1003, %v1239
    %v1242 = vxor.u32 %v1241, 2147483648
    %v1243 = vmul.f32 %v1242, 1.442695
    %v1244 = vpow.pop %v1243
    %v1245 = vadd.f32 %v1244, 1.0
    %v1246 = vrcp.pop %v1245
    %v1247 = vmul.f32 1.0, %v1246
    %v1248 = vadd.f32 %v1233, %v1083
    %v1250 = vrot.slane %v1248, 6
    %1251 = vrot.lane.b32.xlu0 %v1250, 64
    %v1252 = vpop.permute.xlu0 %1251
    %v1254 = vmul.f32 %v1247, %v1252
    %1256 = vrot.lane.b32.xlu0 %v1254, 64
    %v1257 = vpop.permute.xlu0 %1256
    %v1259 = vadd.f32 %v1003, %v1257
    %v1260 = vtanh.pop %v1259
    %v1261 = vsub.f32 1.0, %v1247
    %1263 = vrot.lane.b32.xlu0 %v1260, 96
    %v1264 = vpop.permute.xlu0 %1263
    %v1266 = vmul.f32 %v1261, %v1264
    %v1268 = vrot.slane %v1188, 7
    %v1270 = vmul.f32 %v1247, %v1268
    %v1271 = vadd.f32 %v1266, %v1270
    %v1272 = vpack.c.bf16 %v1271, %v1271
    %v1274 = vrot.slane %v1272, 1
    %1275 = vrot.lane.b32.xlu0 %v1274, 96
    %v1276 = vpop.permute.xlu0 %1275
    %v1278 = vsel %vm207, %v1276, 0
    %1280 = vmatprep.subr.bf16.mxu0 0
    %1281 = vmatpush1.bf16.msra.mxu0 %v1023
    %1282 = vmatprep.subr.bf16.mxu0 0
    %1283 = vmatpush1.bf16.msra.mxu0 %v1024
    %1284 = vmatprep.subr.bf16.mxu0 0
    %1285 = vmatpush1.bf16.msra.mxu0 0
    %1286 = vmatprep.subr.bf16.mxu0 0
    %1287 = vmatpush1.bf16.msra.mxu0 0
    %1288 = vmatprep.subr.bf16.mxu0 0
    %1289 = vmatpush1.bf16.msra.mxu0 0
    %1290 = vmatprep.subr.bf16.mxu0 0
    %1291 = vmatpush1.bf16.msra.mxu0 0
    %1292 = vmatprep.subr.bf16.mxu0 0
    %1293 = vmatpush1.bf16.msra.mxu0 0
    %1294 = vmatprep.subr.bf16.mxu0 0
    %1295 = vmatpush1.bf16.msra.mxu0 0
    %1296 = vmatprep.subr.bf16.mxu0 0
    %1297 = vmatpush1.bf16.msra.mxu0 0
    %1298 = vmatprep.subr.bf16.mxu0 0
    %1299 = vmatpush1.bf16.msra.mxu0 0
    %1300 = vmatprep.subr.bf16.mxu0 0
    %1301 = vmatpush1.bf16.msra.mxu0 0
    %1302 = vmatprep.subr.bf16.mxu0 0
    %1303 = vmatpush1.bf16.msra.mxu0 0
    %1304 = vmatprep.subr.bf16.mxu0 0
    %1305 = vmatpush1.bf16.msra.mxu0 0
    %1306 = vmatprep.subr.bf16.mxu0 0
    %1307 = vmatpush1.bf16.msra.mxu0 0
    %1308 = vmatprep.subr.bf16.mxu0 0
    %1309 = vmatpush1.bf16.msra.mxu0 0
    %1310 = vmatprep.subr.bf16.mxu0 0
    %1311 = vmatpush1.bf16.msra.mxu0 0
    %1312 = vmatprep.mubr.bf16.mxu0 0
    %1313 = vmatmul.mubr.bf16.gmra.mrb[0].mxu0 %v1278
    %v1314 = vpop.f32.mrb[0].mxu0
    %v1315 = vadd.f32 0.0, %v1314
    %v1316 = vpop.f32.mrb[0].mxu0
    %v1317 = vpop.f32.mrb[0].mxu0
    %v1318 = vpop.f32.mrb[0].mxu0
    %1319 = vdwg.mxu0
    %v1321 = vrot.slane %v1315, 5
    %v1323 = vadd.f32 %v1003, %v1321
    %v1324 = vxor.u32 %v1323, 2147483648
    %v1325 = vmul.f32 %v1324, 1.442695
    %v1326 = vpow.pop %v1325
    %v1327 = vadd.f32 %v1326, 1.0
    %v1328 = vrcp.pop %v1327
    %v1329 = vmul.f32 1.0, %v1328
    %v1330 = vadd.f32 %v1315, %v1083
    %v1332 = vrot.slane %v1330, 5
    %1333 = vrot.lane.b32.xlu0 %v1332, 64
    %v1334 = vpop.permute.xlu0 %1333
    %v1336 = vmul.f32 %v1329, %v1334
    %1338 = vrot.lane.b32.xlu0 %v1336, 64
    %v1339 = vpop.permute.xlu0 %1338
    %v1341 = vadd.f32 %v1003, %v1339
    %v1342 = vtanh.pop %v1341
    %v1343 = vsub.f32 1.0, %v1329
    %1345 = vrot.lane.b32.xlu0 %v1342, 96
    %v1346 = vpop.permute.xlu0 %1345
    %v1348 = vmul.f32 %v1343, %v1346
    %v1350 = vrot.slane %v1271, 7
    %v1352 = vmul.f32 %v1329, %v1350
    %v1353 = vadd.f32 %v1348, %v1352
    %v1354 = vpack.c.bf16 %v1353, %v1353
    %v1356 = vshrl.u32 %v1354, 16
    %v1358 = vrot.slane %v1356, 1
    %1359 = vrot.lane.b32.xlu0 %v1358, 96
    %v1360 = vpop.permute.xlu0 %1359
    %v1362 = vsel %vm207, %v1360, 0
    %1364 = vmatprep.subr.bf16.mxu0 0
    %1365 = vmatpush1.bf16.msra.mxu0 %v1023
    %1366 = vmatprep.subr.bf16.mxu0 0
    %1367 = vmatpush1.bf16.msra.mxu0 %v1024
    %1368 = vmatprep.subr.bf16.mxu0 0
    %1369 = vmatpush1.bf16.msra.mxu0 0
    %1370 = vmatprep.subr.bf16.mxu0 0
    %1371 = vmatpush1.bf16.msra.mxu0 0
    %1372 = vmatprep.subr.bf16.mxu0 0
    %1373 = vmatpush1.bf16.msra.mxu0 0
    %1374 = vmatprep.subr.bf16.mxu0 0
    %1375 = vmatpush1.bf16.msra.mxu0 0
    %1376 = vmatprep.subr.bf16.mxu0 0
    %1377 = vmatpush1.bf16.msra.mxu0 0
    %1378 = vmatprep.subr.bf16.mxu0 0
    %1379 = vmatpush1.bf16.msra.mxu0 0
    %1380 = vmatprep.subr.bf16.mxu0 0
    %1381 = vmatpush1.bf16.msra.mxu0 0
    %1382 = vmatprep.subr.bf16.mxu0 0
    %1383 = vmatpush1.bf16.msra.mxu0 0
    %1384 = vmatprep.subr.bf16.mxu0 0
    %1385 = vmatpush1.bf16.msra.mxu0 0
    %1386 = vmatprep.subr.bf16.mxu0 0
    %1387 = vmatpush1.bf16.msra.mxu0 0
    %1388 = vmatprep.subr.bf16.mxu0 0
    %1389 = vmatpush1.bf16.msra.mxu0 0
    %1390 = vmatprep.subr.bf16.mxu0 0
    %1391 = vmatpush1.bf16.msra.mxu0 0
    %1392 = vmatprep.subr.bf16.mxu0 0
    %1393 = vmatpush1.bf16.msra.mxu0 0
    %1394 = vmatprep.subr.bf16.mxu0 0
    %1395 = vmatpush1.bf16.msra.mxu0 0
    %1396 = vmatprep.mubr.bf16.mxu0 0
    %1397 = vmatmul.mubr.bf16.gmra.mrb[0].mxu0 %v1362
    %v1398 = vpop.f32.mrb[0].mxu0
    %v1399 = vadd.f32 0.0, %v1398
    %v1400 = vpop.f32.mrb[0].mxu0
    %v1401 = vpop.f32.mrb[0].mxu0
    %v1402 = vpop.f32.mrb[0].mxu0
    %1403 = vdwg.mxu0
    %v1405 = vrot.slane %v1399, 4
    %v1407 = vadd.f32 %v1003, %v1405
    %v1408 = vxor.u32 %v1407, 2147483648
    %v1409 = vmul.f32 %v1408, 1.442695
    %v1410 = vpow.pop %v1409
    %v1411 = vadd.f32 %v1410, 1.0
    %v1412 = vrcp.pop %v1411
    %v1413 = vmul.f32 1.0, %v1412
    %v1414 = vadd.f32 %v1399, %v1083
    %v1416 = vrot.slane %v1414, 4
    %1417 = vrot.lane.b32.xlu0 %v1416, 64
    %v1418 = vpop.permute.xlu0 %1417
    %v1420 = vmul.f32 %v1413, %v1418
    %1422 = vrot.lane.b32.xlu0 %v1420, 64
    %v1423 = vpop.permute.xlu0 %1422
    %v1425 = vadd.f32 %v1003, %v1423
    %v1426 = vtanh.pop %v1425
    %v1427 = vsub.f32 1.0, %v1413
    %1429 = vrot.lane.b32.xlu0 %v1426, 96
    %v1430 = vpop.permute.xlu0 %1429
    %v1432 = vmul.f32 %v1427, %v1430
    %v1434 = vrot.slane %v1353, 7
    %v1436 = vmul.f32 %v1413, %v1434
    %v1437 = vadd.f32 %v1432, %v1436
    %v1438 = vpack.c.bf16 %v1437, %v1437
    %v1440 = vrot.slane %v1438, 2
    %1441 = vrot.lane.b32.xlu0 %v1440, 96
    %v1442 = vpop.permute.xlu0 %1441
    %v1444 = vsel %vm207, %v1442, 0
    %1446 = vmatprep.subr.bf16.mxu0 0
    %1447 = vmatpush1.bf16.msra.mxu0 %v1023
    %1448 = vmatprep.subr.bf16.mxu0 0
    %1449 = vmatpush1.bf16.msra.mxu0 %v1024
    %1450 = vmatprep.subr.bf16.mxu0 0
    %1451 = vmatpush1.bf16.msra.mxu0 0
    %1452 = vmatprep.subr.bf16.mxu0 0
    %1453 = vmatpush1.bf16.msra.mxu0 0
    %1454 = vmatprep.subr.bf16.mxu0 0
    %1455 = vmatpush1.bf16.msra.mxu0 0
    %1456 = vmatprep.subr.bf16.mxu0 0
    %1457 = vmatpush1.bf16.msra.mxu0 0
    %1458 = vmatprep.subr.bf16.mxu0 0
    %1459 = vmatpush1.bf16.msra.mxu0 0
    %1460 = vmatprep.subr.bf16.mxu0 0
    %1461 = vmatpush1.bf16.msra.mxu0 0
    %1462 = vmatprep.subr.bf16.mxu0 0
    %1463 = vmatpush1.bf16.msra.mxu0 0
    %1464 = vmatprep.subr.bf16.mxu0 0
    %1465 = vmatpush1.bf16.msra.mxu0 0
    %1466 = vmatprep.subr.bf16.mxu0 0
    %1467 = vmatpush1.bf16.msra.mxu0 0
    %1468 = vmatprep.subr.bf16.mxu0 0
    %1469 = vmatpush1.bf16.msra.mxu0 0
    %1470 = vmatprep.subr.bf16.mxu0 0
    %1471 = vmatpush1.bf16.msra.mxu0 0
    %1472 = vmatprep.subr.bf16.mxu0 0
    %1473 = vmatpush1.bf16.msra.mxu0 0
    %1474 = vmatprep.subr.bf16.mxu0 0
    %1475 = vmatpush1.bf16.msra.mxu0 0
    %1476 = vmatprep.subr.bf16.mxu0 0
    %1477 = vmatpush1.bf16.msra.mxu0 0
    %1478 = vmatprep.mubr.bf16.mxu0 0
    %1479 = vmatmul.mubr.bf16.gmra.mrb[0].mxu0 %v1444
    %v1480 = vpop.f32.mrb[0].mxu0
    %v1481 = vadd.f32 0.0, %v1480
    %v1482 = vpop.f32.mrb[0].mxu0
    %v1483 = vpop.f32.mrb[0].mxu0
    %v1484 = vpop.f32.mrb[0].mxu0
    %1485 = vdwg.mxu0
    %v1487 = vrot.slane %v1481, 3
    %v1489 = vadd.f32 %v1003, %v1487
    %v1490 = vxor.u32 %v1489, 2147483648
    %v1491 = vmul.f32 %v1490, 1.442695
    %v1492 = vpow.pop %v1491
    %v1493 = vadd.f32 %v1492, 1.0
    %v1494 = vrcp.pop %v1493
    %v1495 = vmul.f32 1.0, %v1494
    %v1496 = vadd.f32 %v1481, %v1083
    %v1498 = vrot.slane %v1496, 3
    %1499 = vrot.lane.b32.xlu0 %v1498, 64
    %v1500 = vpop.permute.xlu0 %1499
    %v1502 = vmul.f32 %v1495, %v1500
    %1504 = vrot.lane.b32.xlu0 %v1502, 64
    %v1505 = vpop.permute.xlu0 %1504
    %v1507 = vadd.f32 %v1003, %v1505
    %v1508 = vtanh.pop %v1507
    %v1509 = vsub.f32 1.0, %v1495
    %1511 = vrot.lane.b32.xlu0 %v1508, 96
    %v1512 = vpop.permute.xlu0 %1511
    %v1514 = vmul.f32 %v1509, %v1512
    %v1516 = vrot.slane %v1437, 7
    %v1518 = vmul.f32 %v1495, %v1516
    %v1519 = vadd.f32 %v1514, %v1518
    %v1520 = vpack.c.bf16 %v1519, %v1519
    %v1522 = vshrl.u32 %v1520, 16
    %v1524 = vrot.slane %v1522, 2
    %1525 = vrot.lane.b32.xlu0 %v1524, 96
    %v1526 = vpop.permute.xlu0 %1525
    %v1528 = vsel %vm207, %v1526, 0
    %1530 = vmatprep.subr.bf16.mxu0 0
    %1531 = vmatpush1.bf16.msra.mxu0 %v1023
    %1532 = vmatprep.subr.bf16.mxu0 0
    %1533 = vmatpush1.bf16.msra.mxu0 %v1024
    %1534 = vmatprep.subr.bf16.mxu0 0
    %1535 = vmatpush1.bf16.msra.mxu0 0
    %1536 = vmatprep.subr.bf16.mxu0 0
    %1537 = vmatpush1.bf16.msra.mxu0 0
    %1538 = vmatprep.subr.bf16.mxu0 0
    %1539 = vmatpush1.bf16.msra.mxu0 0
    %1540 = vmatprep.subr.bf16.mxu0 0
    %1541 = vmatpush1.bf16.msra.mxu0 0
    %1542 = vmatprep.subr.bf16.mxu0 0
    %1543 = vmatpush1.bf16.msra.mxu0 0
    %1544 = vmatprep.subr.bf16.mxu0 0
    %1545 = vmatpush1.bf16.msra.mxu0 0
    %1546 = vmatprep.subr.bf16.mxu0 0
    %1547 = vmatpush1.bf16.msra.mxu0 0
    %1548 = vmatprep.subr.bf16.mxu0 0
    %1549 = vmatpush1.bf16.msra.mxu0 0
    %1550 = vmatprep.subr.bf16.mxu0 0
    %1551 = vmatpush1.bf16.msra.mxu0 0
    %1552 = vmatprep.subr.bf16.mxu0 0
    %1553 = vmatpush1.bf16.msra.mxu0 0
    %1554 = vmatprep.subr.bf16.mxu0 0
    %1555 = vmatpush1.bf16.msra.mxu0 0
    %1556 = vmatprep.subr.bf16.mxu0 0
    %1557 = vmatpush1.bf16.msra.mxu0 0
    %1558 = vmatprep.subr.bf16.mxu0 0
    %1559 = vmatpush1.bf16.msra.mxu0 0
    %1560 = vmatprep.subr.bf16.mxu0 0
    %1561 = vmatpush1.bf16.msra.mxu0 0
    %1562 = vmatprep.mubr.bf16.mxu0 0
    %1563 = vmatmul.mubr.bf16.gmra.mrb[0].mxu0 %v1528
    %v1564 = vpop.f32.mrb[0].mxu0
    %v1565 = vadd.f32 0.0, %v1564
    %v1566 = vpop.f32.mrb[0].mxu0
    %v1567 = vpop.f32.mrb[0].mxu0
    %v1568 = vpop.f32.mrb[0].mxu0
    %1569 = vdwg.mxu0
    %v1571 = vrot.slane %v1565, 2
    %v1573 = vadd.f32 %v1003, %v1571
    %v1574 = vxor.u32 %v1573, 2147483648
    %v1575 = vmul.f32 %v1574, 1.442695
    %v1576 = vpow.pop %v1575
    %v1577 = vadd.f32 %v1576, 1.0
    %v1578 = vrcp.pop %v1577
    %v1579 = vmul.f32 1.0, %v1578
    %v1580 = vadd.f32 %v1565, %v1083
    %v1582 = vrot.slane %v1580, 2
    %1583 = vrot.lane.b32.xlu0 %v1582, 64
    %v1584 = vpop.permute.xlu0 %1583
    %v1586 = vmul.f32 %v1579, %v1584
    %1588 = vrot.lane.b32.xlu0 %v1586, 64
    %v1589 = vpop.permute.xlu0 %1588
    %v1591 = vadd.f32 %v1003, %v1589
    %v1592 = vtanh.pop %v1591
    %v1593 = vsub.f32 1.0, %v1579
    %1595 = vrot.lane.b32.xlu0 %v1592, 96
    %v1596 = vpop.permute.xlu0 %1595
    %v1598 = vmul.f32 %v1593, %v1596
    %v1600 = vrot.slane %v1519, 7
    %v1602 = vmul.f32 %v1579, %v1600
    %v1603 = vadd.f32 %v1598, %v1602
    %v1604 = vpack.c.bf16 %v1603, %v1603
    %v1606 = vrot.slane %v1604, 3
    %1607 = vrot.lane.b32.xlu0 %v1606, 96
    %v1608 = vpop.permute.xlu0 %1607
    %v1610 = vsel %vm207, %v1608, 0
    %1612 = vmatprep.subr.bf16.mxu0 0
    %1613 = vmatpush1.bf16.msra.mxu0 %v1023
    %1614 = vmatprep.subr.bf16.mxu0 0
    %1615 = vmatpush1.bf16.msra.mxu0 %v1024
    %1616 = vmatprep.subr.bf16.mxu0 0
    %1617 = vmatpush1.bf16.msra.mxu0 0
    %1618 = vmatprep.subr.bf16.mxu0 0
    %1619 = vmatpush1.bf16.msra.mxu0 0
    %1620 = vmatprep.subr.bf16.mxu0 0
    %1621 = vmatpush1.bf16.msra.mxu0 0
    %1622 = vmatprep.subr.bf16.mxu0 0
    %1623 = vmatpush1.bf16.msra.mxu0 0
    %1624 = vmatprep.subr.bf16.mxu0 0
    %1625 = vmatpush1.bf16.msra.mxu0 0
    %1626 = vmatprep.subr.bf16.mxu0 0
    %1627 = vmatpush1.bf16.msra.mxu0 0
    %1628 = vmatprep.subr.bf16.mxu0 0
    %1629 = vmatpush1.bf16.msra.mxu0 0
    %1630 = vmatprep.subr.bf16.mxu0 0
    %1631 = vmatpush1.bf16.msra.mxu0 0
    %1632 = vmatprep.subr.bf16.mxu0 0
    %1633 = vmatpush1.bf16.msra.mxu0 0
    %1634 = vmatprep.subr.bf16.mxu0 0
    %1635 = vmatpush1.bf16.msra.mxu0 0
    %1636 = vmatprep.subr.bf16.mxu0 0
    %1637 = vmatpush1.bf16.msra.mxu0 0
    %1638 = vmatprep.subr.bf16.mxu0 0
    %1639 = vmatpush1.bf16.msra.mxu0 0
    %1640 = vmatprep.subr.bf16.mxu0 0
    %1641 = vmatpush1.bf16.msra.mxu0 0
    %1642 = vmatprep.subr.bf16.mxu0 0
    %1643 = vmatpush1.bf16.msra.mxu0 0
    %1644 = vmatprep.mubr.bf16.mxu0 0
    %1645 = vmatmul.mubr.bf16.gmra.mrb[0].mxu0 %v1610
    %v1646 = vpop.f32.mrb[0].mxu0
    %v1647 = vadd.f32 0.0, %v1646
    %v1648 = vpop.f32.mrb[0].mxu0
    %v1649 = vpop.f32.mrb[0].mxu0
    %v1650 = vpop.f32.mrb[0].mxu0
    %1651 = vdwg.mxu0
    %v1653 = vrot.slane %v1647, 1
    %v1655 = vadd.f32 %v1003, %v1653
    %v1656 = vxor.u32 %v1655, 2147483648
    %v1657 = vmul.f32 %v1656, 1.442695
    %v1658 = vpow.pop %v1657
    %v1659 = vadd.f32 %v1658, 1.0
    %v1660 = vrcp.pop %v1659
    %v1661 = vmul.f32 1.0, %v1660
    %v1662 = vadd.f32 %v1647, %v1083
    %v1664 = vrot.slane %v1662, 1
    %1665 = vrot.lane.b32.xlu0 %v1664, 64
    %v1666 = vpop.permute.xlu0 %1665
    %v1668 = vmul.f32 %v1661, %v1666
    %1670 = vrot.lane.b32.xlu0 %v1668, 64
    %v1671 = vpop.permute.xlu0 %1670
    %v1673 = vadd.f32 %v1003, %v1671
    %v1674 = vtanh.pop %v1673
    %v1675 = vsub.f32 1.0, %v1661
    %1677 = vrot.lane.b32.xlu0 %v1674, 96
    %v1678 = vpop.permute.xlu0 %1677
    %v1680 = vmul.f32 %v1675, %v1678
    %v1682 = vrot.slane %v1603, 7
    %v1684 = vmul.f32 %v1661, %v1682
    %v1685 = vadd.f32 %v1680, %v1684
    %vm1686 = vcmask 1040384
    %v1687 = vsel %vm1686, %v1107, %v1188
    %vm1688 = vcmask 1041408
    %v1689 = vsel %vm1688, %v1687, %v1271
    %vm1690 = vcmask 1042432
    %v1691 = vsel %vm1690, %v1689, %v1353
    %vm1692 = vcmask 1043456
    %v1693 = vsel %vm1692, %v1691, %v1437
    %vm1694 = vcmask 1044480
    %v1695 = vsel %vm1694, %v1693, %v1519
    %vm1696 = vcmask 1045504
    %v1697 = vsel %vm1696, %v1695, %v1603
    %vm1698 = vcmask 1046528
    %v1699 = vsel %vm1698, %v1697, %v1685
    %v1700 = vpack.c.bf16 %v1699, %v1699
    %v1701 = vld [vmem:[%s10] sm:$0xff]
    %v1702 = vld [vmem:[%s10 + $0x8] sm:$0xff]
    %v1703 = vld [vmem:[%s10 + $0x10] sm:$0xff]
    %v1704 = vld [vmem:[%s10 + $0x18] sm:$0xff]
    %v1705 = vld [vmem:[%s11] sm:$0x3]
    %v1707 = vlaneseq
    %v1708 = vshrl.u32 %v1707, 7
    %v1709 = vsub.s32 0, %v1708
    %v1710 = vrot.slane %v1705, %v1709
    %v1711 = vlaneseq
    %v1712 = vshrl.u32 %v1711, 7
    %v1713 = vsub.s32 1, %v1712
    %v1714 = vrot.slane %v1705, %v1713
    %1718 = vrot.lane.b32.xlu0 %v1700, 96
    %v1719 = vpop.permute.xlu0 %1718
    %v1724 = vunpack.c.l.b16 %v1701
    %v1725 = vunpack.c.h.b16 %v1701
    %v1726 = vunpack.c.l.b16 %v1702
    %v1727 = vunpack.c.h.b16 %v1702
    %v1728 = vunpack.c.l.b16 %v1703
    %v1729 = vunpack.c.h.b16 %v1703
    %v1730 = vunpack.c.l.b16 %v1704
    %v1731 = vunpack.c.h.b16 %v1704
    %v1732 = vpack.c.b16 %v1726, %v1724
    %v1733 = vpack.c.b16 %v1727, %v1725
    %v1734 = vpack.c.b16 %v1730, %v1728
    %v1735 = vpack.c.b16 %v1731, %v1729
    %v1741 = vsel %vm207, %v1719, 0
    %1743 = vmatprep.subr.bf16.mxu0 %v1733
    %1744 = vmatpush1.bf16.msra.mxu0 %v1732
    %1745 = vmatprep.subr.bf16.mxu0 %v1735
    %1746 = vmatpush1.bf16.msra.mxu0 %v1734
    %1747 = vmatprep.subr.bf16.mxu0 0
    %1748 = vmatpush1.bf16.msra.mxu0 0
    %1749 = vmatprep.subr.bf16.mxu0 0
    %1750 = vmatpush1.bf16.msra.mxu0 0
    %1751 = vmatprep.subr.bf16.mxu0 0
    %1752 = vmatpush1.bf16.msra.mxu0 0
    %1753 = vmatprep.subr.bf16.mxu0 0
    %1754 = vmatpush1.bf16.msra.mxu0 0
    %1755 = vmatprep.subr.bf16.mxu0 0
    %1756 = vmatpush1.bf16.msra.mxu0 0
    %1757 = vmatprep.subr.bf16.mxu0 0
    %1758 = vmatpush1.bf16.msra.mxu0 0
    %1759 = vmatprep.subr.bf16.mxu0 0
    %1760 = vmatpush1.bf16.msra.mxu0 0
    %1761 = vmatprep.subr.bf16.mxu0 0
    %1762 = vmatpush1.bf16.msra.mxu0 0
    %1763 = vmatprep.subr.bf16.mxu0 0
    %1764 = vmatpush1.bf16.msra.mxu0 0
    %1765 = vmatprep.subr.bf16.mxu0 0
    %1766 = vmatpush1.bf16.msra.mxu0 0
    %1767 = vmatprep.subr.bf16.mxu0 0
    %1768 = vmatpush1.bf16.msra.mxu0 0
    %1769 = vmatprep.subr.bf16.mxu0 0
    %1770 = vmatpush1.bf16.msra.mxu0 0
    %1771 = vmatprep.subr.bf16.mxu0 0
    %1772 = vmatpush1.bf16.msra.mxu0 0
    %1773 = vmatprep.subr.bf16.mxu0 0
    %1774 = vmatpush1.bf16.msra.mxu0 0
    %1775 = vmatprep.mubr.bf16.mxu0 0
    %1776 = vmatmul.mubr.bf16.gmra.mrb[0].mxu0 %v1741
    %v1777 = vpop.f32.mrb[0].mxu0
    %v1778 = vadd.f32 %v1710, %v1777
    %v1779 = vpop.f32.mrb[0].mxu0
    %v1780 = vadd.f32 %v1714, %v1779
    %v1781 = vpop.f32.mrb[0].mxu0
    %v1782 = vpop.f32.mrb[0].mxu0
    %1783 = vdwg.mxu0
    %1784 = vst [vmem:[#allocation2] sm:$0xff] %v1778
    %1785 = vst [vmem:[#allocation2 + $0x8] sm:$0xff] %v1780
    // Predicated region
    $region50: #{seq2seq_gru_forward.1} parent=1 // pred_check
      _
    $region51: #{seq2seq_gru_forward.1} parent=1 // pred_check_branch
      %1787 = sbr.rel (0) target = $region53
    $region52: #{seq2seq_gru_forward.1} parent=1 // pred_region
      %s1789 = ssub.s32 256, 256
      %1790 = vsyncadd [#allocation3], %s1789
      %s1792 = sshll.u32 [#allocation2], 4
      %s1793 = int_to_ptr.vmem [resolvable:$true] %s1792
      %1795 = dma.vmem_to_hbm [thread:$0]  %s1793, 256, %s12, [#allocation3]
    $region53: #{seq2seq_gru_forward.1} parent=1 // pred_fallthru
      _
    // Predicated region
    $region54: #{seq2seq_gru_forward.1} parent=1 // pred_check
      _
    $region55: #{seq2seq_gru_forward.1} parent=1 // pred_check_branch
      %1797 = sbr.rel (0) target = $region57
    $region56: #{seq2seq_gru_forward.1} parent=1 // pred_region
      %1798 = dma.done [#allocation3], 256
    $region57: #{seq2seq_gru_forward.1} parent=1 // pred_fallthru
      _
    %1799 = vsyncpa [#allocation3], 1

</llo_original>
